<compile_context>
chip_gen: v7x
topology: tpu7x:2x2x1
jax: 0.10.0
libtpu: 0.0.40
codegen_flags: <defaults>
</compile_context>

<pallas_src>
import functools

import jax
import jax.numpy as jnp
from jax.experimental import pallas as pl
from jax.experimental.pallas import tpu as pltpu

K_HOPS = 3        # APPNP K
ALPHA = 0.1       # APPNP teleport probability
NEURON = 64
HID = 16
VMEM_LIMIT = 32 * 1024 * 1024   # safe on v5e (16 MiB scoped default) and v7x (64 MiB physical)
NEG_BIG = -1e30


# ----------------------------------------------------------------------------
# Kernel 1: one APPNP hop on the raw features
#   h_new = (1 - alpha) * A_hat @ h + alpha * x0
#   grid = (row tiles [parallel], k tiles [arbitrary reduction])
#   A_hat streamed blockwise in bf16, f32 accumulation in VMEM scratch.
# ----------------------------------------------------------------------------
def _hop_kernel(a_ref, h_ref, x0_ref, out_ref, acc_ref):
    k = pl.program_id(1)

    @pl.when(k == 0)
    def _():
        acc_ref[...] = jnp.zeros_like(acc_ref)

    acc_ref[...] += jnp.dot(a_ref[...].astype(jnp.float32), h_ref[...],
                            preferred_element_type=jnp.float32)

    @pl.when(k == pl.num_programs(1) - 1)
    def _():
        out_ref[...] = (1.0 - ALPHA) * acc_ref[...] + ALPHA * x0_ref[...]


def _hop(a_bf, h, x0, *, tm, tk):
    n, f = h.shape
    return pl.pallas_call(
        _hop_kernel,
        out_shape=jax.ShapeDtypeStruct((n, f), jnp.float32),
        grid_spec=pltpu.PrefetchScalarGridSpec(
            num_scalar_prefetch=0,
            grid=(n // tm, n // tk),
            in_specs=[pl.BlockSpec((tm, tk), lambda i, k: (i, k)),   # A_hat (bf16)
                      pl.BlockSpec((tk, f), lambda i, k: (k, 0)),    # h (current hop)
                      pl.BlockSpec((tm, f), lambda i, k: (i, 0))],   # x0 (resident over k)
            out_specs=pl.BlockSpec((tm, f), lambda i, k: (i, 0)),
            scratch_shapes=[pltpu.VMEM((tm, f), jnp.float32)],
        ),
        compiler_params=pltpu.CompilerParams(
            dimension_semantics=("parallel", "arbitrary"),
            vmem_limit_bytes=VMEM_LIMIT),
    )(a_bf, h, x0)


# ----------------------------------------------------------------------------
# Kernel 2: fused nn1 (W1 + bias + ReLU) epilogue per node tile, per-graph
#           masked online-softmax 'self_average' aggregation (accumulator over
#           node tiles), attention MLP head gated to the last grid step.
# ----------------------------------------------------------------------------
def _agg_head_kernel(h_ref, w1_ref, b1_ref, wc_ref, bc_ref, mask_ref, clos_t_ref,
                     wa1_ref, ba1_ref, wa2_ref, ba2_ref,
                     out_ref, m_sc, l_sc, g_sc):
    i = pl.program_id(0)

    @pl.when(i == 0)
    def _():
        m_sc[...] = jnp.full(m_sc.shape, NEG_BIG, m_sc.dtype)
        l_sc[...] = jnp.zeros_like(l_sc)
        g_sc[...] = jnp.zeros_like(g_sc)

    # nn1 for this node tile (exact: propagation is linear, so applying W1 after
    # propagating raw x equals the reference nn1(prop(x))); (N,64) never hits HBM.
    h = jnp.maximum(
        jnp.dot(h_ref[...], w1_ref[...], preferred_element_type=jnp.float32)
        + b1_ref[...], 0.0)                                              # (TM, 64)

    # closeness score per node — VPU/XLU path: broadcast-mul + sublane reduce
    score = jnp.sum(wc_ref[...] * clos_t_ref[...], axis=0, keepdims=True) \
        + bc_ref[0, 0]                                                   # (1, TM)

    mask = mask_ref[...]                                                 # (B, TM)
    s = jnp.where(mask > 0.0, score, NEG_BIG)                            # (B, TM)

    # online (flash-style) masked softmax accumulation over node tiles
    m_prev = m_sc[...]
    m_new = jnp.maximum(m_prev, jnp.max(s, axis=1, keepdims=True))       # (B, 1)
    scale = jnp.exp(m_prev - m_new)
    p = mask * jnp.exp(s - m_new)                                        # (B, TM)

    l_sc[...] = scale * l_sc[...] + jnp.sum(p, axis=1, keepdims=True)
    g_sc[...] = scale * g_sc[...] + jnp.dot(p, h, preferred_element_type=jnp.float32)
    m_sc[...] = m_new

    @pl.when(i == pl.num_programs(0) - 1)
    def _():
        l = l_sc[...]
        inv_l = jnp.where(l > 0.0, 1.0 / l, 0.0)       # guard all-masked graphs
        # 'self_average': mean(curr_size * softmax * x) == softmax-weighted sum
        g = g_sc[...] * inv_l                                            # (B, 64)
        g = jnp.maximum(
            jnp.dot(g, wa1_ref[...], preferred_element_type=jnp.float32) + ba1_ref[...],
            0.0)
        out_ref[...] = (
            jnp.dot(g, wa2_ref[...], preferred_element_type=jnp.float32) + ba2_ref[...])


def _agg_head(h_prop, w1, b1, wc_col, bc, mask, clos_t, wa1, ba1, wa2, ba2,
              *, num_graphs, ys, tm):
    n, fx = h_prop.shape
    f = w1.shape[1]
    fc = clos_t.shape[0]
    hid = wa1.shape[1]
    # TODO(synk): out is (B, ys) with ys=1 (lane-sparse store, written once); pad ys
    # or emit the (B, hid) pre-head activations instead if B or ys ever grow.
    return pl.pallas_call(
        _agg_head_kernel,
        out_shape=jax.ShapeDtypeStruct((num_graphs, ys), jnp.float32),
        grid_spec=pltpu.PrefetchScalarGridSpec(
            num_scalar_prefetch=0,
            grid=(n // tm,),
            in_specs=[
                pl.BlockSpec((tm, fx), lambda i: (i, 0)),                # h_prop
                pl.BlockSpec((fx, f), lambda i: (0, 0)),                 # w1
                pl.BlockSpec((1, f), lambda i: (0, 0)),                  # b1
                pl.BlockSpec((fc, 1), lambda i: (0, 0)),                 # wc (col)
                pl.BlockSpec(memory_space=pltpu.MemorySpace.SMEM),       # bc scalar
                pl.BlockSpec((num_graphs, tm), lambda i: (0, i)),        # mask
                pl.BlockSpec((fc, tm), lambda i: (0, i)),                # clos_t
                pl.BlockSpec((f, hid), lambda i: (0, 0)),                # wa1
                pl.BlockSpec((1, hid), lambda i: (0, 0)),                # ba1
                pl.BlockSpec((hid, ys), lambda i: (0, 0)),               # wa2
                pl.BlockSpec((1, ys), lambda i: (0, 0)),                 # ba2
            ],
            out_specs=pl.BlockSpec((num_graphs, ys), lambda i: (0, 0)),
            scratch_shapes=[pltpu.VMEM((num_graphs, 1), jnp.float32),    # running max
                            pltpu.VMEM((num_graphs, 1), jnp.float32),    # running sum
                            pltpu.VMEM((num_graphs, f), jnp.float32)],   # g accumulator
        ),
        compiler_params=pltpu.CompilerParams(
            dimension_semantics=("arbitrary",),
            vmem_limit_bytes=VMEM_LIMIT),
    )(h_prop, w1, b1, wc_col, bc, mask, clos_t, wa1, ba1, wa2, ba2)


# ----------------------------------------------------------------------------
# Full forward
# ----------------------------------------------------------------------------
@functools.partial(jax.jit, static_argnames=("num_graphs", "ys", "tm", "tk"))
def appnp_net_forward(x, a_bf16, mask, clos_t, params, *, num_graphs, ys,
                      tm=256, tk=512):
    (w1, b1, wc_col, bc, wa1, ba1, wa2, ba2) = params
    n = x.shape[0]
    tm = min(tm, n)
    tk = min(tk, n)
    assert n % tm == 0 and n % tk == 0, "N must be divisible by the tile sizes"

    # K propagation hops on the raw features (f = Fx); A_hat streamed as bf16.
    h = x
    for _ in range(K_HOPS):
        h = _hop(a_bf16, h, x, tm=tm, tk=tk)

    # fused nn1 epilogue, masked softmax aggregation, attention MLP head
    return _agg_head(h, w1, b1, wc_col, bc, mask, clos_t, wa1, ba1, wa2, ba2,
                     num_graphs=num_graphs, ys=ys, tm=tm)


# ----------------------------------------------------------------------------
# Pure-JAX reference (mirrors the PyTorch module order: prop -> nn1 -> softmax agg -> head)
# ----------------------------------------------------------------------------
def reference_forward(x, a_hat, mask, clos_t, params):
    (w1, b1, wc_col, bc, wa1, ba1, wa2, ba2) = params
    h = x
    for _ in range(K_HOPS):
        h = (1.0 - ALPHA) * (a_hat @ h) + ALPHA * x
    h = jnp.maximum(h @ w1 + b1, 0.0)
    score = (clos_t.T @ wc_col).T + bc                       # (1, N)
    s = jnp.where(mask > 0.0, score, NEG_BIG)
    m = jnp.max(s, axis=1, keepdims=True)
    e = jnp.where(mask > 0.0, jnp.exp(s - m), 0.0)
    w_att = e / jnp.sum(e, axis=1, keepdims=True)
    g = w_att @ h
    g = jnp.maximum(g @ wa1 + ba1, 0.0)
    return g @ wa2 + ba2


def build_a_hat(edge_index, n):
    """PyG gcn_norm-style: add self loops, D^{-1/2} (A+I) D^{-1/2} (edges symmetric)."""
    src, dst = edge_index
    a = jnp.zeros((n, n), jnp.float32).at[src, dst].set(1.0)
    a = a + jnp.eye(n, dtype=jnp.float32)
    deg = jnp.sum(a, axis=1)
    d_inv_sqrt = 1.0 / jnp.sqrt(deg)
    return a * d_inv_sqrt[:, None] * d_inv_sqrt[None, :]


if __name__ == "__main__":
    # --- small synthetic graph batch (large enough to exercise the 2x2 tiling) ---
    N = 256          # total nodes
    B = 4            # graphs in batch
    NODES_PER_GRAPH = N // B
    FX = 16          # x_s (input node feature dim)
    FC = 8           # args.attention_num_feature
    YS = 1

    key = jax.random.PRNGKey(0)
    keys = jax.random.split(key, 10)

    x = jax.random.normal(keys[0], (N, FX), jnp.float32)
    clos = jax.random.normal(keys[1], (N, FC), jnp.float32)
    clos_t = jnp.asarray(clos.T)                               # (FC, N)

    batch = jnp.repeat(jnp.arange(B, dtype=jnp.int32), NODES_PER_GRAPH)
    mask = (batch[None, :] == jnp.arange(B, dtype=jnp.int32)[:, None]).astype(jnp.float32)

    # edge_index: undirected ring inside each graph
    src_list, dst_list = [], []
    for g in range(B):
        base = g * NODES_PER_GRAPH
        for i in range(NODES_PER_GRAPH):
            u = base + i
            v = base + (i + 1) % NODES_PER_GRAPH
            src_list += [u, v]
            dst_list += [v, u]
    edge_index = jnp.array([src_list, dst_list], dtype=jnp.int32)
    a_hat = build_a_hat(edge_index, N)

    # bf16 streaming copy of A_hat (memory-bound hops); reference uses the same values.
    a_bf16 = a_hat.astype(jnp.bfloat16)
    a_ref32 = a_bf16.astype(jnp.float32)

    # --- deterministic parameter init (stored as (in, out) = torch weight.T) ---
    w1 = 0.1 * jax.random.normal(keys[2], (FX, NEURON), jnp.float32)      # nn1
    b1 = 0.1 * jax.random.normal(keys[3], (1, NEURON), jnp.float32)
    wc_col = 0.1 * jax.random.normal(keys[4], (FC, 1), jnp.float32)       # closeness_layer
    bc = 0.1 * jax.random.normal(keys[5], (1, 1), jnp.float32)
    wa1 = 0.1 * jax.random.normal(keys[6], (NEURON, HID), jnp.float32)    # attention1
    ba1 = 0.1 * jax.random.normal(keys[7], (1, HID), jnp.float32)
    wa2 = 0.1 * jax.random.normal(keys[8], (HID, YS), jnp.float32)        # attention2
    ba2 = 0.1 * jax.random.normal(keys[9], (1, YS), jnp.float32)
    params = (w1, b1, wc_col, bc, wa1, ba1, wa2, ba2)

    # TODO(synk): only the 'self_average' aggregator branch is implemented; the other
    # aggregator branches ('average_pool', 'max_pool', 'size_*', 'self_max') are not.

    # small tiles here so the test exercises the multi-tile grid / accumulator paths
    out = appnp_net_forward(x, a_bf16, mask, clos_t, params,
                            num_graphs=B, ys=YS, tm=128, tk=128)
    out = jax.block_until_ready(out)

    ref = reference_forward(x, a_ref32, mask, clos_t, params)
    assert out.shape == (B, YS)
    assert jnp.allclose(out, ref, atol=1e-2, rtol=1e-2), (out, ref)

    print("KERNEL_OK")
</pallas_src>

<mosaic_0001>
module attributes {stable_mosaic.version = 11 : i64} {
  func.func @_hop_kernel(%arg0: i32, %arg1: i32, %arg2: memref<128x128xbf16, #tpu.memory_space<vmem>>, %arg3: memref<128x16xf32, #tpu.memory_space<vmem>>, %arg4: memref<128x16xf32, #tpu.memory_space<vmem>>, %arg5: memref<128x16xf32, #tpu.memory_space<vmem>>, %arg6: memref<128x16xf32, #tpu.memory_space<vmem>>) attributes {dimension_semantics = [#tpu.dimension_semantics<parallel>, #tpu.dimension_semantics<arbitrary>], iteration_bounds = array<i64: 2, 2>, scalar_prefetch = 0 : i64, scratch_operands = 1 : i64, tpu.core_type = #tpu.core_type<tc>, window_params = [{transform_indices = @transform_0, window_bounds = array<i64: 128, 128>}, {transform_indices = @transform_1, window_bounds = array<i64: 128, 16>}, {transform_indices = @transform_2, window_bounds = array<i64: 128, 16>}, {transform_indices = @transform_3, window_bounds = array<i64: 128, 16>}]} {
    %c0_i32 = arith.constant 0 : i32
    %0 = arith.cmpi eq, %arg1, %c0_i32 : i32
    %1 = arith.extui %0 : i1 to i32
    %c0_i32_0 = arith.constant 0 : i32
    %2 = arith.cmpi ne, %1, %c0_i32_0 : i32
    scf.if %2 {
      %cst_9 = arith.constant 0.000000e+00 : f32
      %13 = vector.broadcast %cst_9 : f32 to vector<128x16xf32>
      %c0_10 = arith.constant 0 : index
      %c0_11 = arith.constant 0 : index
      %14 = vector.load %arg6[%c0_10, %c0_11] : memref<128x16xf32, #tpu.memory_space<vmem>>, vector<128x16xf32>
      tpu.vector_store %arg6[%c0_10, %c0_11], %13 {strides = array<i32>} : memref<128x16xf32, #tpu.memory_space<vmem>>, vector<128x16xf32>,
    } else {
    }
    %c0 = arith.constant 0 : index
    %c0_1 = arith.constant 0 : index
    %3 = vector.load %arg6[%c0, %c0_1] : memref<128x16xf32, #tpu.memory_space<vmem>>, vector<128x16xf32>
    %c0_2 = arith.constant 0 : index
    %c0_3 = arith.constant 0 : index
    %4 = vector.load %arg2[%c0_2, %c0_3] : memref<128x128xbf16, #tpu.memory_space<vmem>>, vector<128x128xbf16>
    %5 = arith.extf %4 : vector<128x128xbf16> to vector<128x128xf32>
    %c0_4 = arith.constant 0 : index
    %c0_5 = arith.constant 0 : index
    %6 = vector.load %arg3[%c0_4, %c0_5] : memref<128x16xf32, #tpu.memory_space<vmem>>, vector<128x16xf32>
    %cst = arith.constant dense<0.000000e+00> : vector<128x16xf32>
    %7 = tpu.matmul %5, %6, %cst {dimension_numbers = #tpu.dot_dimension_numbers<[1], [0], [0], [1], [0, 0, 1, 1], [], []>} : vector<128x128xf32>, vector<128x16xf32>, vector<128x16xf32> -> vector<128x16xf32>
    %8 = arith.addf %3, %7 : vector<128x16xf32>
    %c0_6 = arith.constant 0 : index
    %c0_7 = arith.constant 0 : index
    %9 = vector.load %arg6[%c0_6, %c0_7] : memref<128x16xf32, #tpu.memory_space<vmem>>, vector<128x16xf32>
    tpu.vector_store %arg6[%c0_6, %c0_7], %8 {strides = array<i32>} : memref<128x16xf32, #tpu.memory_space<vmem>>, vector<128x16xf32>,
    %c1_i32 = arith.constant 1 : i32
    %10 = arith.cmpi eq, %arg1, %c1_i32 : i32
    %11 = arith.extui %10 : i1 to i32
    %c0_i32_8 = arith.constant 0 : i32
    %12 = arith.cmpi ne, %11, %c0_i32_8 : i32
    scf.if %12 {
      %c0_9 = arith.constant 0 : index
      %c0_10 = arith.constant 0 : index
      %13 = vector.load %arg6[%c0_9, %c0_10] : memref<128x16xf32, #tpu.memory_space<vmem>>, vector<128x16xf32>
      %cst_11 = arith.constant 0.899999976 : f32
      %14 = vector.broadcast %cst_11 : f32 to vector<128x16xf32>
      %15 = arith.mulf %14, %13 : vector<128x16xf32>
      %c0_12 = arith.constant 0 : index
      %c0_13 = arith.constant 0 : index
      %16 = vector.load %arg4[%c0_12, %c0_13] : memref<128x16xf32, #tpu.memory_space<vmem>>, vector<128x16xf32>
      %cst_14 = arith.constant 1.000000e-01 : f32
      %17 = vector.broadcast %cst_14 : f32 to vector<128x16xf32>
      %18 = arith.mulf %17, %16 : vector<128x16xf32>
      %19 = arith.addf %15, %18 : vector<128x16xf32>
      %c0_15 = arith.constant 0 : index
      %c0_16 = arith.constant 0 : index
      %20 = vector.load %arg5[%c0_15, %c0_16] : memref<128x16xf32, #tpu.memory_space<vmem>>, vector<128x16xf32>
      tpu.vector_store %arg5[%c0_15, %c0_16], %19 {strides = array<i32>} : memref<128x16xf32, #tpu.memory_space<vmem>>, vector<128x16xf32>,
    } else {
    }
    return
  }
  func.func @transform_0(%arg0: i32, %arg1: i32) -> (i32, i32) {
    %c0_i32 = arith.constant 0 : i32
    return %arg0, %arg1 : i32, i32
  }
  func.func @transform_1(%arg0: i32, %arg1: i32) -> (i32, i32) {
    %c0_i32 = arith.constant 0 : i32
    %c0_i32_0 = arith.constant 0 : i32
    return %arg1, %c0_i32 : i32, i32
  }
  func.func @transform_2(%arg0: i32, %arg1: i32) -> (i32, i32) {
    %c0_i32 = arith.constant 0 : i32
    %c0_i32_0 = arith.constant 0 : i32
    return %arg0, %c0_i32 : i32, i32
  }
  func.func @transform_3(%arg0: i32, %arg1: i32) -> (i32, i32) {
    %c0_i32 = arith.constant 0 : i32
    %c0_i32_0 = arith.constant 0 : i32
    return %arg0, %c0_i32 : i32, i32
  }
}

module attributes {stable_mosaic.version = 11 : i64} {
  func.func @_agg_head_kernel(%arg0: i32, %arg1: memref<128x16xf32, #tpu.memory_space<vmem>>, %arg2: memref<16x64xf32, #tpu.memory_space<vmem>>, %arg3: memref<1x64xf32, #tpu.memory_space<vmem>>, %arg4: memref<8x1xf32, #tpu.memory_space<vmem>>, %arg5: memref<1x1xf32, #tpu.memory_space<smem>>, %arg6: memref<4x128xf32, #tpu.memory_space<vmem>>, %arg7: memref<8x128xf32, #tpu.memory_space<vmem>>, %arg8: memref<64x16xf32, #tpu.memory_space<vmem>>, %arg9: memref<1x16xf32, #tpu.memory_space<vmem>>, %arg10: memref<16x1xf32, #tpu.memory_space<vmem>>, %arg11: memref<1x1xf32, #tpu.memory_space<vmem>>, %arg12: memref<4x1xf32, #tpu.memory_space<vmem>>, %arg13: memref<4x1xf32, #tpu.memory_space<vmem>>, %arg14: memref<4x1xf32, #tpu.memory_space<vmem>>, %arg15: memref<4x64xf32, #tpu.memory_space<vmem>>) attributes {dimension_semantics = [#tpu.dimension_semantics<arbitrary>], iteration_bounds = array<i64: 2>, scalar_prefetch = 0 : i64, scratch_operands = 3 : i64, tpu.core_type = #tpu.core_type<tc>, window_params = [{transform_indices = @transform_0, window_bounds = array<i64: 128, 16>}, {pipeline_mode = #tpu.pipeline_mode<synchronous>, transform_indices = @transform_1, window_bounds = array<i64: 16, 64>}, {pipeline_mode = #tpu.pipeline_mode<synchronous>, transform_indices = @transform_2, window_bounds = array<i64: 1, 64>}, {pipeline_mode = #tpu.pipeline_mode<synchronous>, transform_indices = @transform_3, window_bounds = array<i64: 8, 1>}, {transform_indices = @transform_4, window_bounds = array<i64: 1, 1>}, {transform_indices = @transform_5, window_bounds = array<i64: 4, 128>}, {transform_indices = @transform_6, window_bounds = array<i64: 8, 128>}, {pipeline_mode = #tpu.pipeline_mode<synchronous>, transform_indices = @transform_7, window_bounds = array<i64: 64, 16>}, {pipeline_mode = #tpu.pipeline_mode<synchronous>, transform_indices = @transform_8, window_bounds = array<i64: 1, 16>}, {pipeline_mode = #tpu.pipeline_mode<synchronous>, transform_indices = @transform_9, window_bounds = array<i64: 16, 1>}, {pipeline_mode = #tpu.pipeline_mode<synchronous>, transform_indices = @transform_10, window_bounds = array<i64: 1, 1>}, {pipeline_mode = #tpu.pipeline_mode<synchronous>, transform_indices = @transform_11, window_bounds = array<i64: 4, 1>}]} {
    %c0_i32 = arith.constant 0 : i32
    %0 = arith.cmpi eq, %arg0, %c0_i32 : i32
    %1 = arith.extui %0 : i1 to i32
    %c0_i32_0 = arith.constant 0 : i32
    %2 = arith.cmpi ne, %1, %c0_i32_0 : i32
    scf.if %2 {
      %cst_34 = arith.constant -1.000000e+30 : f32
      %53 = vector.broadcast %cst_34 : f32 to vector<4x1xf32>
      %c0_35 = arith.constant 0 : index
      %c0_36 = arith.constant 0 : index
      %54 = vector.load %arg13[%c0_35, %c0_36] : memref<4x1xf32, #tpu.memory_space<vmem>>, vector<4x1xf32>
      tpu.vector_store %arg13[%c0_35, %c0_36], %53 {strides = array<i32>} : memref<4x1xf32, #tpu.memory_space<vmem>>, vector<4x1xf32>,
      %cst_37 = arith.constant 0.000000e+00 : f32
      %55 = vector.broadcast %cst_37 : f32 to vector<4x1xf32>
      %c0_38 = arith.constant 0 : index
      %c0_39 = arith.constant 0 : index
      %56 = vector.load %arg14[%c0_38, %c0_39] : memref<4x1xf32, #tpu.memory_space<vmem>>, vector<4x1xf32>
      tpu.vector_store %arg14[%c0_38, %c0_39], %55 {strides = array<i32>} : memref<4x1xf32, #tpu.memory_space<vmem>>, vector<4x1xf32>,
      %cst_40 = arith.constant 0.000000e+00 : f32
      %57 = vector.broadcast %cst_40 : f32 to vector<4x64xf32>
      %c0_41 = arith.constant 0 : index
      %c0_42 = arith.constant 0 : index
      %58 = vector.load %arg15[%c0_41, %c0_42] : memref<4x64xf32, #tpu.memory_space<vmem>>, vector<4x64xf32>
      tpu.vector_store %arg15[%c0_41, %c0_42], %57 {strides = array<i32>} : memref<4x64xf32, #tpu.memory_space<vmem>>, vector<4x64xf32>,
    } else {
    }
    %c0 = arith.constant 0 : index
    %c0_1 = arith.constant 0 : index
    %3 = vector.load %arg1[%c0, %c0_1] : memref<128x16xf32, #tpu.memory_space<vmem>>, vector<128x16xf32>
    %c0_2 = arith.constant 0 : index
    %c0_3 = arith.constant 0 : index
    %4 = vector.load %arg2[%c0_2, %c0_3] : memref<16x64xf32, #tpu.memory_space<vmem>>, vector<16x64xf32>
    %cst = arith.constant dense<0.000000e+00> : vector<128x64xf32>
    %5 = tpu.matmul %3, %4, %cst {dimension_numbers = #tpu.dot_dimension_numbers<[1], [0], [0], [1], [0, 0, 1, 1], [], []>} : vector<128x16xf32>, vector<16x64xf32>, vector<128x64xf32> -> vector<128x64xf32>
    %c0_4 = arith.constant 0 : index
    %c0_5 = arith.constant 0 : index
    %6 = vector.load %arg3[%c0_4, %c0_5] : memref<1x64xf32, #tpu.memory_space<vmem>>, vector<1x64xf32>
    %7 = vector.broadcast %6 : vector<1x64xf32> to vector<128x64xf32>
    %8 = arith.addf %5, %7 : vector<128x64xf32>
    %cst_6 = arith.constant 0.000000e+00 : f32
    %9 = vector.broadcast %cst_6 : f32 to vector<128x64xf32>
    %10 = arith.maximumf %8, %9 : vector<128x64xf32>
    %c0_7 = arith.constant 0 : index
    %c0_8 = arith.constant 0 : index
    %11 = vector.load %arg4[%c0_7, %c0_8] : memref<8x1xf32, #tpu.memory_space<vmem>>, vector<8x1xf32>
    %c0_9 = arith.constant 0 : index
    %c0_10 = arith.constant 0 : index
    %12 = vector.load %arg7[%c0_9, %c0_10] : memref<8x128xf32, #tpu.memory_space<vmem>>, vector<8x128xf32>
    %13 = vector.broadcast %11 : vector<8x1xf32> to vector<8x128xf32>
    %14 = arith.mulf %13, %12 : vector<8x128xf32>
    %cst_11 = arith.constant dense<0.000000e+00> : vector<128xf32>
    %15 = vector.multi_reduction <add>, %14, %cst_11 [0] : vector<8x128xf32> to vector<128xf32>
    %16 = vector.shape_cast %15 : vector<128xf32> to vector<1x128xf32>
    %c0_12 = arith.constant 0 : index
    %c0_13 = arith.constant 0 : index
    %17 = memref.load %arg5[%c0_12, %c0_13] : memref<1x1xf32, #tpu.memory_space<smem>>
    %18 = vector.broadcast %17 : f32 to vector<1x128xf32>
    %19 = arith.addf %16, %18 : vector<1x128xf32>
    %c0_14 = arith.constant 0 : index
    %c0_15 = arith.constant 0 : index
    %20 = vector.load %arg6[%c0_14, %c0_15] : memref<4x128xf32, #tpu.memory_space<vmem>>, vector<4x128xf32>
    %cst_16 = arith.constant 0.000000e+00 : f32
    %21 = vector.broadcast %cst_16 : f32 to vector<4x128xf32>
    %22 = arith.cmpf ogt, %20, %21 : vector<4x128xf32>
    %cst_17 = arith.constant -1.000000e+30 : f32
    %23 = vector.shape_cast %19 : vector<1x128xf32> to vector<1x128xf32>
    %24 = vector.broadcast %23 : vector<1x128xf32> to vector<4x128xf32>
    %25 = vector.broadcast %cst_17 : f32 to vector<4x128xf32>
    %26 = arith.select %22, %24, %25 : vector<4x128xi1>, vector<4x128xf32>
    %c0_18 = arith.constant 0 : index
    %c0_19 = arith.constant 0 : index
    %27 = vector.load %arg13[%c0_18, %c0_19] : memref<4x1xf32, #tpu.memory_space<vmem>>, vector<4x1xf32>
    %cst_20 = arith.constant dense<0xFF800000> : vector<4xf32>
    %28 = vector.multi_reduction <maximumf>, %26, %cst_20 [1] : vector<4x128xf32> to vector<4xf32>
    %29 = vector.shape_cast %28 : vector<4xf32> to vector<4x1xf32>
    %30 = arith.maximumf %27, %29 : vector<4x1xf32>
    %31 = arith.subf %27, %30 : vector<4x1xf32>
    %32 = math.exp %31 : vector<4x1xf32>
    %33 = vector.broadcast %30 : vector<4x1xf32> to vector<4x128xf32>
    %34 = arith.subf %26, %33 : vector<4x128xf32>
    %35 = math.exp %34 : vector<4x128xf32>
    %36 = arith.mulf %20, %35 : vector<4x128xf32>
    %c0_21 = arith.constant 0 : index
    %c0_22 = arith.constant 0 : index
    %37 = vector.load %arg14[%c0_21, %c0_22] : memref<4x1xf32, #tpu.memory_space<vmem>>, vector<4x1xf32>
    %38 = arith.mulf %32, %37 : vector<4x1xf32>
    %cst_23 = arith.constant dense<0.000000e+00> : vector<4xf32>
    %39 = vector.multi_reduction <add>, %36, %cst_23 [1] : vector<4x128xf32> to vector<4xf32>
    %40 = vector.shape_cast %39 : vector<4xf32> to vector<4x1xf32>
    %41 = arith.addf %38, %40 : vector<4x1xf32>
    %c0_24 = arith.constant 0 : index
    %c0_25 = arith.constant 0 : index
    %42 = vector.load %arg14[%c0_24, %c0_25] : memref<4x1xf32, #tpu.memory_space<vmem>>, vector<4x1xf32>
    tpu.vector_store %arg14[%c0_24, %c0_25], %41 {strides = array<i32>} : memref<4x1xf32, #tpu.memory_space<vmem>>, vector<4x1xf32>,
    %c0_26 = arith.constant 0 : index
    %c0_27 = arith.constant 0 : index
    %43 = vector.load %arg15[%c0_26, %c0_27] : memref<4x64xf32, #tpu.memory_space<vmem>>, vector<4x64xf32>
    %44 = vector.broadcast %32 : vector<4x1xf32> to vector<4x64xf32>
    %45 = arith.mulf %44, %43 : vector<4x64xf32>
    %cst_28 = arith.constant dense<0.000000e+00> : vector<4x64xf32>
    %46 = tpu.matmul %36, %10, %cst_28 {dimension_numbers = #tpu.dot_dimension_numbers<[1], [0], [0], [1], [0, 0, 1, 1], [], []>} : vector<4x128xf32>, vector<128x64xf32>, vector<4x64xf32> -> vector<4x64xf32>
    %47 = arith.addf %45, %46 : vector<4x64xf32>
    %c0_29 = arith.constant 0 : index
    %c0_30 = arith.constant 0 : index
    %48 = vector.load %arg15[%c0_29, %c0_30] : memref<4x64xf32, #tpu.memory_space<vmem>>, vector<4x64xf32>
    tpu.vector_store %arg15[%c0_29, %c0_30], %47 {strides = array<i32>} : memref<4x64xf32, #tpu.memory_space<vmem>>, vector<4x64xf32>,
    %c0_31 = arith.constant 0 : index
    %c0_32 = arith.constant 0 : index
    %49 = vector.load %arg13[%c0_31, %c0_32] : memref<4x1xf32, #tpu.memory_space<vmem>>, vector<4x1xf32>
    tpu.vector_store %arg13[%c0_31, %c0_32], %30 {strides = array<i32>} : memref<4x1xf32, #tpu.memory_space<vmem>>, vector<4x1xf32>,
    %c1_i32 = arith.constant 1 : i32
    %50 = arith.cmpi eq, %arg0, %c1_i32 : i32
    %51 = arith.extui %50 : i1 to i32
    %c0_i32_33 = arith.constant 0 : i32
    %52 = arith.cmpi ne, %51, %c0_i32_33 : i32
    scf.if %52 {
      %c0_34 = arith.constant 0 : index
      %c0_35 = arith.constant 0 : index
      %53 = vector.load %arg14[%c0_34, %c0_35] : memref<4x1xf32, #tpu.memory_space<vmem>>, vector<4x1xf32>
      %cst_36 = arith.constant 0.000000e+00 : f32
      %54 = vector.broadcast %cst_36 : f32 to vector<4x1xf32>
      %55 = arith.cmpf ogt, %53, %54 : vector<4x1xf32>
      %cst_37 = arith.constant 1.000000e+00 : f32
      %56 = vector.broadcast %cst_37 : f32 to vector<4x1xf32>
      %57 = arith.divf %56, %53 : vector<4x1xf32>
      %cst_38 = arith.constant 0.000000e+00 : f32
      %58 = vector.broadcast %cst_38 : f32 to vector<4x1xf32>
      %59 = arith.select %55, %57, %58 : vector<4x1xi1>, vector<4x1xf32>
      %c0_39 = arith.constant 0 : index
      %c0_40 = arith.constant 0 : index
      %60 = vector.load %arg15[%c0_39, %c0_40] : memref<4x64xf32, #tpu.memory_space<vmem>>, vector<4x64xf32>
      %61 = vector.broadcast %59 : vector<4x1xf32> to vector<4x64xf32>
      %62 = arith.mulf %60, %61 : vector<4x64xf32>
      %c0_41 = arith.constant 0 : index
      %c0_42 = arith.constant 0 : index
      %63 = vector.load %arg8[%c0_41, %c0_42] : memref<64x16xf32, #tpu.memory_space<vmem>>, vector<64x16xf32>
      %cst_43 = arith.constant dense<0.000000e+00> : vector<4x16xf32>
      %64 = tpu.matmul %62, %63, %cst_43 {dimension_numbers = #tpu.dot_dimension_numbers<[1], [0], [0], [1], [0, 0, 1, 1], [], []>} : vector<4x64xf32>, vector<64x16xf32>, vector<4x16xf32> -> vector<4x16xf32>
      %c0_44 = arith.constant 0 : index
      %c0_45 = arith.constant 0 : index
      %65 = vector.load %arg9[%c0_44, %c0_45] : memref<1x16xf32, #tpu.memory_space<vmem>>, vector<1x16xf32>
      %66 = vector.broadcast %65 : vector<1x16xf32> to vector<4x16xf32>
      %67 = arith.addf %64, %66 : vector<4x16xf32>
      %cst_46 = arith.constant 0.000000e+00 : f32
      %68 = vector.broadcast %cst_46 : f32 to vector<4x16xf32>
      %69 = arith.maximumf %67, %68 : vector<4x16xf32>
      %c0_47 = arith.constant 0 : index
      %c0_48 = arith.constant 0 : index
      %70 = vector.load %arg10[%c0_47, %c0_48] : memref<16x1xf32, #tpu.memory_space<vmem>>, vector<16x1xf32>
      %cst_49 = arith.constant dense<0.000000e+00> : vector<4x1xf32>
      %71 = tpu.matmul %69, %70, %cst_49 {dimension_numbers = #tpu.dot_dimension_numbers<[1], [0], [0], [1], [0, 0, 1, 1], [], []>} : vector<4x16xf32>, vector<16x1xf32>, vector<4x1xf32> -> vector<4x1xf32>
      %c0_50 = arith.constant 0 : index
      %c0_51 = arith.constant 0 : index
      %72 = vector.load %arg11[%c0_50, %c0_51] : memref<1x1xf32, #tpu.memory_space<vmem>>, vector<1x1xf32>
      %73 = vector.broadcast %72 : vector<1x1xf32> to vector<4x1xf32>
      %74 = arith.addf %71, %73 : vector<4x1xf32>
      %c0_52 = arith.constant 0 : index
      %c0_53 = arith.constant 0 : index
      %75 = vector.load %arg12[%c0_52, %c0_53] : memref<4x1xf32, #tpu.memory_space<vmem>>, vector<4x1xf32>
      tpu.vector_store %arg12[%c0_52, %c0_53], %74 {strides = array<i32>} : memref<4x1xf32, #tpu.memory_space<vmem>>, vector<4x1xf32>,
    } else {
    }
    return
  }
  func.func @transform_0(%arg0: i32) -> (i32, i32) {
    %c0_i32 = arith.constant 0 : i32
    %c0_i32_0 = arith.constant 0 : i32
    return %arg0, %c0_i32 : i32, i32
  }
  func.func @transform_1(%arg0: i32) -> (i32, i32) {
    %c0_i32 = arith.constant 0 : i32
    %c0_i32_0 = arith.constant 0 : i32
    %c0_i32_1 = arith.constant 0 : i32
    return %c0_i32, %c0_i32_0 : i32, i32
  }
  func.func @transform_2(%arg0: i32) -> (i32, i32) {
    %c0_i32 = arith.constant 0 : i32
    %c0_i32_0 = arith.constant 0 : i32
    %c0_i32_1 = arith.constant 0 : i32
    return %c0_i32, %c0_i32_0 : i32, i32
  }
  func.func @transform_3(%arg0: i32) -> (i32, i32) {
    %c0_i32 = arith.constant 0 : i32
    %c0_i32_0 = arith.constant 0 : i32
    %c0_i32_1 = arith.constant 0 : i32
    return %c0_i32, %c0_i32_0 : i32, i32
  }
  func.func @transform_4(%arg0: i32) -> (i32, i32) {
    %c0_i32 = arith.constant 0 : i32
    %c0_i32_0 = arith.constant 0 : i32
    %c0_i32_1 = arith.constant 0 : i32
    return %c0_i32, %c0_i32_0 : i32, i32
  }
  func.func @transform_5(%arg0: i32) -> (i32, i32) {
    %c0_i32 = arith.constant 0 : i32
    %c0_i32_0 = arith.constant 0 : i32
    return %c0_i32, %arg0 : i32, i32
  }
  func.func @transform_6(%arg0: i32) -> (i32, i32) {
    %c0_i32 = arith.constant 0 : i32
    %c0_i32_0 = arith.constant 0 : i32
    return %c0_i32, %arg0 : i32, i32
  }
  func.func @transform_7(%arg0: i32) -> (i32, i32) {
    %c0_i32 = arith.constant 0 : i32
    %c0_i32_0 = arith.constant 0 : i32
    %c0_i32_1 = arith.constant 0 : i32
    return %c0_i32, %c0_i32_0 : i32, i32
  }
  func.func @transform_8(%arg0: i32) -> (i32, i32) {
    %c0_i32 = arith.constant 0 : i32
    %c0_i32_0 = arith.constant 0 : i32
    %c0_i32_1 = arith.constant 0 : i32
    return %c0_i32, %c0_i32_0 : i32, i32
  }
  func.func @transform_9(%arg0: i32) -> (i32, i32) {
    %c0_i32 = arith.constant 0 : i32
    %c0_i32_0 = arith.constant 0 : i32
    %c0_i32_1 = arith.constant 0 : i32
    return %c0_i32, %c0_i32_0 : i32, i32
  }
  func.func @transform_10(%arg0: i32) -> (i32, i32) {
    %c0_i32 = arith.constant 0 : i32
    %c0_i32_0 = arith.constant 0 : i32
    %c0_i32_1 = arith.constant 0 : i32
    return %c0_i32, %c0_i32_0 : i32, i32
  }
  func.func @transform_11(%arg0: i32) -> (i32, i32) {
    %c0_i32 = arith.constant 0 : i32
    %c0_i32_0 = arith.constant 0 : i32
    %c0_i32_1 = arith.constant 0 : i32
    return %c0_i32, %c0_i32_0 : i32, i32
  }
}

</mosaic_0001>

<llo_original>
// kernel: appnp_net_forward.7
$region0: #{appnp_net_forward.7}
  #allocation0 [shape = 'u32[]', space=smem, size = 0x4, offset = 0x4, fixed_abs, tag = 'smem constant byte address 0x4 - core index']
  #allocation1 [shape = 'u32[144,128]{1,0:T(1,128)}', space=vmem, size = 0x12000, scoped, tag = 'internal scratch']
  #allocation2 [shape = 'f32[4,1]{1,0:T(4,128)}', space=vmem, size = 0x800, scoped, tag = 'scratch operand']
  #allocation3 [shape = 'f32[4,1]{1,0:T(4,128)}', space=vmem, size = 0x800, scoped, tag = 'scratch operand']
  #allocation4 [shape = 'f32[4,64]{1,0:T(4,128)}', space=vmem, size = 0x800, scoped, tag = 'scratch operand']
  #allocation5 [shape = 'f32[1,1]{1,0:T(1,128)S(6)}', space=smem, size = 0x200, scoped, tag = 'scoped memory for appnp_net_forward.7']
  #allocation6 [shape = 'f32[1,1]{1,0:T(1,128)S(1)}', space=vmem, size = 0x200, scoped, tag = 'scoped memory for appnp_net_forward.7']
  %s0 = inlined_call_operand.vmem [shape: f32[256,16], index: 0, kind: input, shape index: {}]
  %s1 = inlined_call_operand.vmem [shape: f32[16,64], index: 1, kind: input, shape index: {}]
  %s2 = inlined_call_operand.vmem [shape: f32[1,64], index: 2, kind: input, shape index: {}]
  %s3 = inlined_call_operand.vmem [shape: f32[8,1], index: 3, kind: input, shape index: {}]
  %s4 = inlined_call_operand.<no memory space> [shape: f32[1,1], index: 4, kind: input, shape index: {}]
  %s5 = inlined_call_operand.vmem [shape: f32[4,256], index: 5, kind: input, shape index: {}]
  %s6 = inlined_call_operand.vmem [shape: f32[8,256], index: 6, kind: input, shape index: {}]
  %s7 = inlined_call_operand.vmem [shape: f32[64,16], index: 7, kind: input, shape index: {}]
  %s8 = inlined_call_operand.vmem [shape: f32[1,16], index: 8, kind: input, shape index: {}]
  %s9 = inlined_call_operand.vmem [shape: f32[16,1], index: 9, kind: input, shape index: {}]
  %s10 = inlined_call_operand.<no memory space> [shape: f32[1,1], index: 10, kind: input, shape index: {}]
  %s11 = inlined_call_operand.vmem [shape: f32[4,1], index: 11, kind: output, shape index: {}]
  %s12 = sld [smem:[#allocation0]]
  $region85: #{appnp_net_forward.7} parent=0
    _
  %s14 = ssub.s32 1, %s12
  %s15 = scalar_select 0, %s14, %s12
  %16 = sst [smem:[#allocation5]] %s4
  %v17 = vstv %s10
  %18 = vst [vmem:[#allocation6] sm:$0x1] %v17
  loop: start=0, step=1, limit=4
  $region2: #{appnp_net_forward.7} parent=0 // loop_pre_header
    _
  $region3: #{appnp_net_forward.7} parent=0 // loop_header
    %s20 = sphi 0, %s24
    %p21 = scmp.ge.s32.totalorder %s20, 4
    %s30 = sphi 0, %s32
    %s33 = sphi 0, %s30
    %s34 = sphi 0, %s33
    %s50 = sphi 0, %s34
    %s54 = sphi 0, %s54
    %s56 = sphi 0, %s54
    %s57 = sphi 0, %s56
    %s71 = sphi 0, %s57
    %s75 = sphi 0, %s75
    %s77 = sphi 0, %s75
    %s78 = sphi 0, %s77
    %s92 = sphi 0, %s78
    %s96 = sphi 0, %s96
    %s98 = sphi 0, %s96
    %s99 = sphi 0, %s98
    %s113 = sphi 0, %s99
    %s117 = sphi 0, %s117
    %s119 = sphi 0, %s117
    %s120 = sphi 0, %s119
    %s134 = sphi 0, %s120
    %s140 = sphi 0, %s142
    %s143 = sphi 0, %s140
    %s144 = sphi 0, %s143
    %s160 = sphi 0, %s144
    %s166 = sphi 0, %s168
    %s169 = sphi 0, %s166
    %s170 = sphi 0, %s169
    %s186 = sphi 0, %s170
    %s190 = sphi 0, %s190
    %s192 = sphi 0, %s190
    %s193 = sphi 0, %s192
    %s207 = sphi 0, %s193
    %s211 = sphi 0, %s211
    %s213 = sphi 0, %s211
    %s214 = sphi 0, %s213
    %s228 = sphi 0, %s214
    %s232 = sphi 0, %s232
    %s234 = sphi 0, %s232
    %s235 = sphi 0, %s234
    %s249 = sphi 0, %s235
    %s253 = sphi 0, %s253
    %s255 = sphi 0, %s253
    %s256 = sphi 0, %s255
    %s270 = sphi 0, %s256
    %s274 = sphi 0, %s274
    %s276 = sphi 0, %s274
    %s277 = sphi 0, %s276
    %s291 = sphi 0, %s277
  $region4: #{appnp_net_forward.7} parent=0 // loop_header_branch
    %23 = sbr.rel (%p21) target = $region8
  $region5: #{appnp_net_forward.7} parent=0 // loop_body
    %s25 = ssub.s32 %s20, 1
    %s26 = ssub.s32 %s20, 2
    %s27 = sadd.s32 %s20, 1
    %s28 = ssub.s32 %s20, %s27
    %p29 = scmp.eq.s32.totalorder %s28, 0
    %s31 = sadd.s32 %s30, 1
    %s32 = scalar_select %p29, %s30, %s31
    %p35 = pneg %p29
    %p36 = scmp.eq.s32.totalorder %s20, 1
    %p37 = por %p35, %p36
    %p38 = scmp.ne.s32.totalorder %s30, %s33
    %p39 = scmp.eq.s32.totalorder %s20, 0
    %p40 = por %p38, %p39
    %p41 = scmp.ne.s32.totalorder %s30, %s33
    %p42 = scmp.eq.s32.totalorder %s25, 1
    %p43 = por %p41, %p42
    %p44 = scmp.ne.s32.totalorder %s33, %s34
    %p45 = scmp.eq.s32.totalorder %s25, 0
    %p46 = por %p44, %p45
    %p47 = scmp.ne.s32.totalorder %s33, %s34
    %p48 = scmp.eq.s32.totalorder %s26, 1
    %p49 = por %p47, %p48
    %p51 = scmp.ne.s32.totalorder %s34, %s50
    %p52 = scmp.eq.s32.totalorder %s26, 0
    %p53 = por %p51, %p52
    %s55 = sadd.s32 %s54, 1
    %p58 = scmp.eq.s32.totalorder %s20, 1
    %p59 = scmp.ne.s32.totalorder %s54, %s56
    %p60 = scmp.eq.s32.totalorder %s20, 0
    %p61 = por %p59, %p60
    %p62 = scmp.ne.s32.totalorder %s54, %s56
    %p63 = scmp.eq.s32.totalorder %s25, 1
    %p64 = por %p62, %p63
    %p65 = scmp.ne.s32.totalorder %s56, %s57
    %p66 = scmp.eq.s32.totalorder %s25, 0
    %p67 = por %p65, %p66
    %p68 = scmp.ne.s32.totalorder %s56, %s57
    %p69 = scmp.eq.s32.totalorder %s26, 1
    %p70 = por %p68, %p69
    %p72 = scmp.ne.s32.totalorder %s57, %s71
    %p73 = scmp.eq.s32.totalorder %s26, 0
    %p74 = por %p72, %p73
    %s76 = sadd.s32 %s75, 1
    %p79 = scmp.eq.s32.totalorder %s20, 1
    %p80 = scmp.ne.s32.totalorder %s75, %s77
    %p81 = scmp.eq.s32.totalorder %s20, 0
    %p82 = por %p80, %p81
    %p83 = scmp.ne.s32.totalorder %s75, %s77
    %p84 = scmp.eq.s32.totalorder %s25, 1
    %p85 = por %p83, %p84
    %p86 = scmp.ne.s32.totalorder %s77, %s78
    %p87 = scmp.eq.s32.totalorder %s25, 0
    %p88 = por %p86, %p87
    %p89 = scmp.ne.s32.totalorder %s77, %s78
    %p90 = scmp.eq.s32.totalorder %s26, 1
    %p91 = por %p89, %p90
    %p93 = scmp.ne.s32.totalorder %s78, %s92
    %p94 = scmp.eq.s32.totalorder %s26, 0
    %p95 = por %p93, %p94
    %s97 = sadd.s32 %s96, 1
    %p100 = scmp.eq.s32.totalorder %s20, 1
    %p101 = scmp.ne.s32.totalorder %s96, %s98
    %p102 = scmp.eq.s32.totalorder %s20, 0
    %p103 = por %p101, %p102
    %p104 = scmp.ne.s32.totalorder %s96, %s98
    %p105 = scmp.eq.s32.totalorder %s25, 1
    %p106 = por %p104, %p105
    %p107 = scmp.ne.s32.totalorder %s98, %s99
    %p108 = scmp.eq.s32.totalorder %s25, 0
    %p109 = por %p107, %p108
    %p110 = scmp.ne.s32.totalorder %s98, %s99
    %p111 = scmp.eq.s32.totalorder %s26, 1
    %p112 = por %p110, %p111
    %p114 = scmp.ne.s32.totalorder %s99, %s113
    %p115 = scmp.eq.s32.totalorder %s26, 0
    %p116 = por %p114, %p115
    %s118 = sadd.s32 %s117, 1
    %p121 = scmp.eq.s32.totalorder %s20, 1
    %p122 = scmp.ne.s32.totalorder %s117, %s119
    %p123 = scmp.eq.s32.totalorder %s20, 0
    %p124 = por %p122, %p123
    %p125 = scmp.ne.s32.totalorder %s117, %s119
    %p126 = scmp.eq.s32.totalorder %s25, 1
    %p127 = por %p125, %p126
    %p128 = scmp.ne.s32.totalorder %s119, %s120
    %p129 = scmp.eq.s32.totalorder %s25, 0
    %p130 = por %p128, %p129
    %p131 = scmp.ne.s32.totalorder %s119, %s120
    %p132 = scmp.eq.s32.totalorder %s26, 1
    %p133 = por %p131, %p132
    %p135 = scmp.ne.s32.totalorder %s120, %s134
    %p136 = scmp.eq.s32.totalorder %s26, 0
    %p137 = por %p135, %p136
    %s138 = ssub.s32 %s20, %s27
    %p139 = scmp.eq.s32.totalorder %s138, 0
    %s141 = sadd.s32 %s140, 1
    %s142 = scalar_select %p139, %s140, %s141
    %p145 = pneg %p139
    %p146 = scmp.eq.s32.totalorder %s20, 1
    %p147 = por %p145, %p146
    %p148 = scmp.ne.s32.totalorder %s140, %s143
    %p149 = scmp.eq.s32.totalorder %s20, 0
    %p150 = por %p148, %p149
    %p151 = scmp.ne.s32.totalorder %s140, %s143
    %p152 = scmp.eq.s32.totalorder %s25, 1
    %p153 = por %p151, %p152
    %p154 = scmp.ne.s32.totalorder %s143, %s144
    %p155 = scmp.eq.s32.totalorder %s25, 0
    %p156 = por %p154, %p155
    %p157 = scmp.ne.s32.totalorder %s143, %s144
    %p158 = scmp.eq.s32.totalorder %s26, 1
    %p159 = por %p157, %p158
    %p161 = scmp.ne.s32.totalorder %s144, %s160
    %p162 = scmp.eq.s32.totalorder %s26, 0
    %p163 = por %p161, %p162
    %s164 = ssub.s32 %s20, %s27
    %p165 = scmp.eq.s32.totalorder %s164, 0
    %s167 = sadd.s32 %s166, 1
    %s168 = scalar_select %p165, %s166, %s167
    %p171 = pneg %p165
    %p172 = scmp.eq.s32.totalorder %s20, 1
    %p173 = por %p171, %p172
    %p174 = scmp.ne.s32.totalorder %s166, %s169
    %p175 = scmp.eq.s32.totalorder %s20, 0
    %p176 = por %p174, %p175
    %p177 = scmp.ne.s32.totalorder %s166, %s169
    %p178 = scmp.eq.s32.totalorder %s25, 1
    %p179 = por %p177, %p178
    %p180 = scmp.ne.s32.totalorder %s169, %s170
    %p181 = scmp.eq.s32.totalorder %s25, 0
    %p182 = por %p180, %p181
    %p183 = scmp.ne.s32.totalorder %s169, %s170
    %p184 = scmp.eq.s32.totalorder %s26, 1
    %p185 = por %p183, %p184
    %p187 = scmp.ne.s32.totalorder %s170, %s186
    %p188 = scmp.eq.s32.totalorder %s26, 0
    %p189 = por %p187, %p188
    %s191 = sadd.s32 %s190, 1
    %p194 = scmp.eq.s32.totalorder %s20, 1
    %p195 = scmp.ne.s32.totalorder %s190, %s192
    %p196 = scmp.eq.s32.totalorder %s20, 0
    %p197 = por %p195, %p196
    %p198 = scmp.ne.s32.totalorder %s190, %s192
    %p199 = scmp.eq.s32.totalorder %s25, 1
    %p200 = por %p198, %p199
    %p201 = scmp.ne.s32.totalorder %s192, %s193
    %p202 = scmp.eq.s32.totalorder %s25, 0
    %p203 = por %p201, %p202
    %p204 = scmp.ne.s32.totalorder %s192, %s193
    %p205 = scmp.eq.s32.totalorder %s26, 1
    %p206 = por %p204, %p205
    %p208 = scmp.ne.s32.totalorder %s193, %s207
    %p209 = scmp.eq.s32.totalorder %s26, 0
    %p210 = por %p208, %p209
    %s212 = sadd.s32 %s211, 1
    %p215 = scmp.eq.s32.totalorder %s20, 1
    %p216 = scmp.ne.s32.totalorder %s211, %s213
    %p217 = scmp.eq.s32.totalorder %s20, 0
    %p218 = por %p216, %p217
    %p219 = scmp.ne.s32.totalorder %s211, %s213
    %p220 = scmp.eq.s32.totalorder %s25, 1
    %p221 = por %p219, %p220
    %p222 = scmp.ne.s32.totalorder %s213, %s214
    %p223 = scmp.eq.s32.totalorder %s25, 0
    %p224 = por %p222, %p223
    %p225 = scmp.ne.s32.totalorder %s213, %s214
    %p226 = scmp.eq.s32.totalorder %s26, 1
    %p227 = por %p225, %p226
    %p229 = scmp.ne.s32.totalorder %s214, %s228
    %p230 = scmp.eq.s32.totalorder %s26, 0
    %p231 = por %p229, %p230
    %s233 = sadd.s32 %s232, 1
    %p236 = scmp.eq.s32.totalorder %s20, 1
    %p237 = scmp.ne.s32.totalorder %s232, %s234
    %p238 = scmp.eq.s32.totalorder %s20, 0
    %p239 = por %p237, %p238
    %p240 = scmp.ne.s32.totalorder %s232, %s234
    %p241 = scmp.eq.s32.totalorder %s25, 1
    %p242 = por %p240, %p241
    %p243 = scmp.ne.s32.totalorder %s234, %s235
    %p244 = scmp.eq.s32.totalorder %s25, 0
    %p245 = por %p243, %p244
    %p246 = scmp.ne.s32.totalorder %s234, %s235
    %p247 = scmp.eq.s32.totalorder %s26, 1
    %p248 = por %p246, %p247
    %p250 = scmp.ne.s32.totalorder %s235, %s249
    %p251 = scmp.eq.s32.totalorder %s26, 0
    %p252 = por %p250, %p251
    %s254 = sadd.s32 %s253, 1
    %p257 = scmp.eq.s32.totalorder %s20, 1
    %p258 = scmp.ne.s32.totalorder %s253, %s255
    %p259 = scmp.eq.s32.totalorder %s20, 0
    %p260 = por %p258, %p259
    %p261 = scmp.ne.s32.totalorder %s253, %s255
    %p262 = scmp.eq.s32.totalorder %s25, 1
    %p263 = por %p261, %p262
    %p264 = scmp.ne.s32.totalorder %s255, %s256
    %p265 = scmp.eq.s32.totalorder %s25, 0
    %p266 = por %p264, %p265
    %p267 = scmp.ne.s32.totalorder %s255, %s256
    %p268 = scmp.eq.s32.totalorder %s26, 1
    %p269 = por %p267, %p268
    %p271 = scmp.ne.s32.totalorder %s256, %s270
    %p272 = scmp.eq.s32.totalorder %s26, 0
    %p273 = por %p271, %p272
    %s275 = sadd.s32 %s274, 1
    %p278 = scmp.eq.s32.totalorder %s20, 1
    %p279 = scmp.ne.s32.totalorder %s274, %s276
    %p280 = scmp.eq.s32.totalorder %s20, 0
    %p281 = por %p279, %p280
    %p282 = scmp.ne.s32.totalorder %s274, %s276
    %p283 = scmp.eq.s32.totalorder %s25, 1
    %p284 = por %p282, %p283
    %p285 = scmp.ne.s32.totalorder %s276, %s277
    %p286 = scmp.eq.s32.totalorder %s25, 0
    %p287 = por %p285, %p286
    %p288 = scmp.ne.s32.totalorder %s276, %s277
    %p289 = scmp.eq.s32.totalorder %s26, 1
    %p290 = por %p288, %p289
    %p292 = scmp.ne.s32.totalorder %s277, %s291
    %p293 = scmp.eq.s32.totalorder %s26, 0
    %p294 = por %p292, %p293
    %p295 = scmp.le.s32.totalorder 1, %s20
    %p296 = scmp.lt.s32.totalorder %s20, 3
    %p297 = pnand %p295, %p296
    %p298 = pneg %p297
    // Predicated region
    $region9: #{appnp_net_forward.7} parent=5 // pred_check
      _
    $region10: #{appnp_net_forward.7} parent=5 // pred_check_branch
      %300 = sbr.rel (%p297) target = $region12
    $region11: #{appnp_net_forward.7} parent=5 // pred_region
      %s301 = ssub.s32 %s20, 1
      // Predicated region
      $region13: #{appnp_net_forward.7} parent=11 // pred_check
        %p302 = pneg %p67
      $region14: #{appnp_net_forward.7} parent=11 // pred_check_branch
        %304 = sbr.rel (%p302) target = $region16
      $region15: #{appnp_net_forward.7} parent=11 // pred_region
        _
      $region16: #{appnp_net_forward.7} parent=11 // pred_fallthru
        _
      // Predicated region
      $region17: #{appnp_net_forward.7} parent=11 // pred_check
        %p305 = pneg %p88
      $region18: #{appnp_net_forward.7} parent=11 // pred_check_branch
        %307 = sbr.rel (%p305) target = $region20
      $region19: #{appnp_net_forward.7} parent=11 // pred_region
        _
      $region20: #{appnp_net_forward.7} parent=11 // pred_fallthru
        _
      // Predicated region
      $region21: #{appnp_net_forward.7} parent=11 // pred_check
        %p308 = pneg %p109
      $region22: #{appnp_net_forward.7} parent=11 // pred_check_branch
        %310 = sbr.rel (%p308) target = $region24
      $region23: #{appnp_net_forward.7} parent=11 // pred_region
        _
      $region24: #{appnp_net_forward.7} parent=11 // pred_fallthru
        _
      // Predicated region
      $region25: #{appnp_net_forward.7} parent=11 // pred_check
        %p311 = pneg %p130
      $region26: #{appnp_net_forward.7} parent=11 // pred_check_branch
        %313 = sbr.rel (%p311) target = $region28
      $region27: #{appnp_net_forward.7} parent=11 // pred_region
        _
      $region28: #{appnp_net_forward.7} parent=11 // pred_fallthru
        _
      // Predicated region
      $region29: #{appnp_net_forward.7} parent=11 // pred_check
        %p314 = pneg %p203
      $region30: #{appnp_net_forward.7} parent=11 // pred_check_branch
        %316 = sbr.rel (%p314) target = $region32
      $region31: #{appnp_net_forward.7} parent=11 // pred_region
        _
      $region32: #{appnp_net_forward.7} parent=11 // pred_fallthru
        _
      // Predicated region
      $region33: #{appnp_net_forward.7} parent=11 // pred_check
        %p317 = pneg %p224
      $region34: #{appnp_net_forward.7} parent=11 // pred_check_branch
        %319 = sbr.rel (%p317) target = $region36
      $region35: #{appnp_net_forward.7} parent=11 // pred_region
        _
      $region36: #{appnp_net_forward.7} parent=11 // pred_fallthru
        _
      // Predicated region
      $region37: #{appnp_net_forward.7} parent=11 // pred_check
        %p320 = pneg %p245
      $region38: #{appnp_net_forward.7} parent=11 // pred_check_branch
        %322 = sbr.rel (%p320) target = $region40
      $region39: #{appnp_net_forward.7} parent=11 // pred_region
        _
      $region40: #{appnp_net_forward.7} parent=11 // pred_fallthru
        _
      // Predicated region
      $region41: #{appnp_net_forward.7} parent=11 // pred_check
        %p323 = pneg %p266
      $region42: #{appnp_net_forward.7} parent=11 // pred_check_branch
        %325 = sbr.rel (%p323) target = $region44
      $region43: #{appnp_net_forward.7} parent=11 // pred_region
        _
      $region44: #{appnp_net_forward.7} parent=11 // pred_fallthru
        _
    $region12: #{appnp_net_forward.7} parent=5 // pred_fallthru
      _
    %p326 = scmp.lt.s32.totalorder %s20, 2
    // Predicated region
    $region45: #{appnp_net_forward.7} parent=5 // pred_check
      %p327 = pneg %p326
    $region46: #{appnp_net_forward.7} parent=5 // pred_check_branch
      %329 = sbr.rel (%p327) target = $region48
    $region47: #{appnp_net_forward.7} parent=5 // pred_region
      // Predicated region
      $region49: #{appnp_net_forward.7} parent=47 // pred_check
        %p330 = pneg %p40
      $region50: #{appnp_net_forward.7} parent=47 // pred_check_branch
        %332 = sbr.rel (%p330) target = $region52
      $region51: #{appnp_net_forward.7} parent=47 // pred_region
        %s333 = smul.u32 16, %s20
        %p334 = scmp.lt.s32.totalorder %s333, 31
        %s335 = scalar_select %p334, %s333, 31
        %s336 = smul.addr %s335, 8
        %s337 = scalar_lea.vmem %s0, %s336
        %s338 = smul.u32 16, %s20
      $region52: #{appnp_net_forward.7} parent=47 // pred_fallthru
        _
      // Predicated region
      $region53: #{appnp_net_forward.7} parent=47 // pred_check
        %p339 = pneg %p150
      $region54: #{appnp_net_forward.7} parent=47 // pred_check_branch
        %341 = sbr.rel (%p339) target = $region56
      $region55: #{appnp_net_forward.7} parent=47 // pred_region
        %p342 = scmp.lt.s32.totalorder %s20, 1
        %s343 = scalar_select %p342, %s20, 1
        %s344 = smul.addr %s343, 4
        %s345 = scalar_lea.vmem %s5, %s344
      $region56: #{appnp_net_forward.7} parent=47 // pred_fallthru
        _
      // Predicated region
      $region57: #{appnp_net_forward.7} parent=47 // pred_check
        %p346 = pneg %p176
      $region58: #{appnp_net_forward.7} parent=47 // pred_check_branch
        %348 = sbr.rel (%p346) target = $region60
      $region59: #{appnp_net_forward.7} parent=47 // pred_region
        %p349 = scmp.lt.s32.totalorder %s20, 1
        %s350 = scalar_select %p349, %s20, 1
        %s351 = smul.addr %s350, 8
        %s352 = scalar_lea.vmem %s6, %s351
      $region60: #{appnp_net_forward.7} parent=47 // pred_fallthru
        _
    $region48: #{appnp_net_forward.7} parent=5 // pred_fallthru
      _
    %p353 = scmp.le.s32.totalorder 1, %s20
    %p354 = scmp.lt.s32.totalorder %s20, 3
    %p355 = pnand %p353, %p354
    %p356 = pneg %p355
    // Predicated region
    $region61: #{appnp_net_forward.7} parent=5 // pred_check
      _
    $region62: #{appnp_net_forward.7} parent=5 // pred_check_branch
      %358 = sbr.rel (%p355) target = $region64
    $region63: #{appnp_net_forward.7} parent=5 // pred_region
      %s359 = ssub.s32 %s20, 1
      %s360 = smul.u32 16, %s25
      %p361 = scmp.lt.s32.totalorder %s360, 31
      %s362 = scalar_select %p361, %s360, 31
      %s363 = smul.addr %s362, 8
      %s364 = scalar_lea.vmem %s0, %s363
      %p365 = pneg %p46
      %p366 = pneg %p43
      %p367 = pneg %p67
      %p368 = pneg %p64
      %p369 = pneg %p88
      %p370 = pneg %p85
      %p371 = pneg %p109
      %p372 = pneg %p106
      %p373 = pneg %p130
      %p374 = pneg %p127
      %p375 = scmp.lt.s32.totalorder %s25, 1
      %s376 = scalar_select %p375, %s25, 1
      %s377 = smul.addr %s376, 4
      %s378 = scalar_lea.vmem %s5, %s377
      %p379 = pneg %p156
      %p380 = pneg %p153
      %p381 = scmp.lt.s32.totalorder %s25, 1
      %s382 = scalar_select %p381, %s25, 1
      %s383 = smul.addr %s382, 8
      %s384 = scalar_lea.vmem %s6, %s383
      %p385 = pneg %p182
      %p386 = pneg %p179
      %p387 = pneg %p203
      %p388 = pneg %p200
      %p389 = pneg %p224
      %p390 = pneg %p221
      %p391 = pneg %p245
      %p392 = pneg %p242
      %p393 = pneg %p266
      %p394 = pneg %p263
      %p395 = pneg %p287
      %p396 = pneg %p284
      %s397 = smul.u32 16, %s25
      %p398 = scmp.lt.s32.totalorder %s397, 31
      %s399 = scalar_select %p398, %s397, 31
      %s400 = smul.addr %s399, 8
      %s401 = scalar_lea.vmem %s0, %s400
      %s402 = smul.u32 16, %s25
      %p403 = scmp.lt.s32.totalorder %s25, 1
      %s404 = scalar_select %p403, %s25, 1
      %s405 = smul.addr %s404, 4
      %s406 = scalar_lea.vmem %s5, %s405
      %p407 = scmp.lt.s32.totalorder %s25, 1
      %s408 = scalar_select %p407, %s25, 1
      %s409 = smul.addr %s408, 8
      %s410 = scalar_lea.vmem %s6, %s409
      %p411 = scmp.eq.s32.totalorder %s25, 0
      // Predicated region
      $region65: #{appnp_net_forward.7} parent=63 // pred_check
        %p412 = pneg %p411
      $region66: #{appnp_net_forward.7} parent=63 // pred_check_branch
        %414 = sbr.rel (%p412) target = $region68
      $region67: #{appnp_net_forward.7} parent=63 // pred_region
        %vm415 = vcmask 3072
        %416 = vst.msk [vmem:[#allocation2] sm:$0xf] %vm415, -1e+30
        %417 = vst.msk [vmem:[#allocation3] sm:$0xf] %vm415, 0.0
        %vm418 = vcmask 519168
        %419 = vst.msk [vmem:[#allocation4] sm:$0xf] %vm418, 0.0
      $region68: #{appnp_net_forward.7} parent=63 // pred_fallthru
        _
      %v420 = vld [vmem:[%s401] sm:$0xff]
      %v421 = vld [vmem:[%s401 + $0x8] sm:$0xff]
      %v422 = vld [vmem:[%s401 + $0x10] sm:$0xff]
      %v423 = vld [vmem:[%s401 + $0x18] sm:$0xff]
      %v424 = vld [vmem:[%s401 + $0x20] sm:$0xff]
      %v425 = vld [vmem:[%s401 + $0x28] sm:$0xff]
      %v426 = vld [vmem:[%s401 + $0x30] sm:$0xff]
      %v427 = vld [vmem:[%s401 + $0x38] sm:$0xff]
      %v428 = vld [vmem:[%s401 + $0x40] sm:$0xff]
      %v429 = vld [vmem:[%s401 + $0x48] sm:$0xff]
      %v430 = vld [vmem:[%s401 + $0x50] sm:$0xff]
      %v431 = vld [vmem:[%s401 + $0x58] sm:$0xff]
      %v432 = vld [vmem:[%s401 + $0x60] sm:$0xff]
      %v433 = vld [vmem:[%s401 + $0x68] sm:$0xff]
      %v434 = vld [vmem:[%s401 + $0x70] sm:$0xff]
      %v435 = vld [vmem:[%s401 + $0x78] sm:$0xff]
      %v436 = vld [vmem:[%s1] sm:$0xff]
      %v437 = vld [vmem:[%s1 + $0x8] sm:$0xff]
      %v438 = vld [vmem:[%s2] sm:$0x1]
      %v440 = vlaneseq
      %v441 = vshrl.u32 %v440, 7
      %v442 = vsub.s32 0, %v441
      %v443 = vrot.slane %v438, %v442
      %vm445 = vcmask 130048
      %v447 = vsel %vm445, %v420, 0
      %v450 = vsel %vm445, %v421, 0
      %v453 = vsel %vm445, %v422, 0
      %v456 = vsel %vm445, %v423, 0
      %v459 = vsel %vm445, %v424, 0
      %v462 = vsel %vm445, %v425, 0
      %v465 = vsel %vm445, %v426, 0
      %v468 = vsel %vm445, %v427, 0
      %v471 = vsel %vm445, %v428, 0
      %v474 = vsel %vm445, %v429, 0
      %v477 = vsel %vm445, %v430, 0
      %v480 = vsel %vm445, %v431, 0
      %v483 = vsel %vm445, %v432, 0
      %v486 = vsel %vm445, %v433, 0
      %v489 = vsel %vm445, %v434, 0
      %v492 = vsel %vm445, %v435, 0
      %494 = vmatprep.subr.mxu0 0.0
      %495 = vmatpush1.msra.mxu0 %v436
      %496 = vmatprep.subr.mxu0 0.0
      %497 = vmatpush1.msra.mxu0 %v437
      %498 = vmatprep.subr.mxu0 0.0
      %499 = vmatpush1.msra.mxu0 0.0
      %500 = vmatprep.subr.mxu0 0.0
      %501 = vmatpush1.msra.mxu0 0.0
      %502 = vmatprep.subr.mxu0 0.0
      %503 = vmatpush1.msra.mxu0 0.0
      %504 = vmatprep.subr.mxu0 0.0
      %505 = vmatpush1.msra.mxu0 0.0
      %506 = vmatprep.subr.mxu0 0.0
      %507 = vmatpush1.msra.mxu0 0.0
      %508 = vmatprep.subr.mxu0 0.0
      %509 = vmatpush1.msra.mxu0 0.0
      %510 = vmatprep.subr.mxu0 0.0
      %511 = vmatpush1.msra.mxu0 0.0
      %512 = vmatprep.subr.mxu0 0.0
      %513 = vmatpush1.msra.mxu0 0.0
      %514 = vmatprep.subr.mxu0 0.0
      %515 = vmatpush1.msra.mxu0 0.0
      %516 = vmatprep.subr.mxu0 0.0
      %517 = vmatpush1.msra.mxu0 0.0
      %518 = vmatprep.subr.mxu0 0.0
      %519 = vmatpush1.msra.mxu0 0.0
      %520 = vmatprep.subr.mxu0 0.0
      %521 = vmatpush1.msra.mxu0 0.0
      %522 = vmatprep.subr.mxu0 0.0
      %523 = vmatpush1.msra.mxu0 0.0
      %524 = vmatprep.subr.mxu0 0.0
      %525 = vmatpush1.msra.mxu0 0.0
      %526 = vmatprep.subr.mxu0 0.0
      %527 = vmatpush1.msra.mxu0 0.0
      %528 = vmatprep.subr.mxu0 0.0
      %529 = vmatpush1.msra.mxu0 0.0
      %530 = vmatprep.subr.mxu0 0.0
      %531 = vmatpush1.msra.mxu0 0.0
      %532 = vmatprep.subr.mxu0 0.0
      %533 = vmatpush1.msra.mxu0 0.0
      %534 = vmatprep.subr.mxu0 0.0
      %535 = vmatpush1.msra.mxu0 0.0
      %536 = vmatprep.subr.mxu0 0.0
      %537 = vmatpush1.msra.mxu0 0.0
      %538 = vmatprep.subr.mxu0 0.0
      %539 = vmatpush1.msra.mxu0 0.0
      %540 = vmatprep.subr.mxu0 0.0
      %541 = vmatpush1.msra.mxu0 0.0
      %542 = vmatprep.subr.mxu0 0.0
      %543 = vmatpush1.msra.mxu0 0.0
      %544 = vmatprep.subr.mxu0 0.0
      %545 = vmatpush1.msra.mxu0 0.0
      %546 = vmatprep.subr.mxu0 0.0
      %547 = vmatpush1.msra.mxu0 0.0
      %548 = vmatprep.subr.mxu0 0.0
      %549 = vmatpush1.msra.mxu0 0.0
      %550 = vmatprep.subr.mxu0 0.0
      %551 = vmatpush1.msra.mxu0 0.0
      %552 = vmatprep.subr.mxu0 0.0
      %553 = vmatpush1.msra.mxu0 0.0
      %554 = vmatprep.subr.mxu0 0.0
      %555 = vmatpush1.msra.mxu0 0.0
      %556 = vmatprep.subr.mxu0 0.0
      %557 = vmatpush1.msra.mxu0 0.0
      %558 = vmatprep.mubr.f32.mxu0 0.0
      %559 = vmatmul.mubr.f32.gmra.mrb[0].mxu0 %v447
      %v560 = vpop.f32.mrb[0].mxu0
      %v561 = vadd.f32 %v443, %v560
      %v562 = vpop.f32.mrb[0].mxu0
      %563 = vmatprep.mubr.f32.mxu0 0.0
      %564 = vmatmul.mubr.f32.gmra.mrb[0].mxu0 %v450
      %v565 = vpop.f32.mrb[0].mxu0
      %v566 = vadd.f32 %v443, %v565
      %v567 = vpop.f32.mrb[0].mxu0
      %568 = vmatprep.mubr.f32.mxu0 0.0
      %569 = vmatmul.mubr.f32.gmra.mrb[0].mxu0 %v453
      %v570 = vpop.f32.mrb[0].mxu0
      %v571 = vadd.f32 %v443, %v570
      %v572 = vpop.f32.mrb[0].mxu0
      %573 = vmatprep.mubr.f32.mxu0 0.0
      %574 = vmatmul.mubr.f32.gmra.mrb[0].mxu0 %v456
      %v575 = vpop.f32.mrb[0].mxu0
      %v576 = vadd.f32 %v443, %v575
      %v577 = vpop.f32.mrb[0].mxu0
      %578 = vmatprep.mubr.f32.mxu0 0.0
      %579 = vmatmul.mubr.f32.gmra.mrb[0].mxu0 %v459
      %v580 = vpop.f32.mrb[0].mxu0
      %v581 = vadd.f32 %v443, %v580
      %v582 = vpop.f32.mrb[0].mxu0
      %583 = vmatprep.mubr.f32.mxu0 0.0
      %584 = vmatmul.mubr.f32.gmra.mrb[0].mxu0 %v462
      %v585 = vpop.f32.mrb[0].mxu0
      %v586 = vadd.f32 %v443, %v585
      %v587 = vpop.f32.mrb[0].mxu0
      %588 = vmatprep.mubr.f32.mxu0 0.0
      %589 = vmatmul.mubr.f32.gmra.mrb[0].mxu0 %v465
      %v590 = vpop.f32.mrb[0].mxu0
      %v591 = vadd.f32 %v443, %v590
      %v592 = vpop.f32.mrb[0].mxu0
      %593 = vmatprep.mubr.f32.mxu0 0.0
      %594 = vmatmul.mubr.f32.gmra.mrb[0].mxu0 %v468
      %v595 = vpop.f32.mrb[0].mxu0
      %v596 = vadd.f32 %v443, %v595
      %v597 = vpop.f32.mrb[0].mxu0
      %598 = vmatprep.mubr.f32.mxu0 0.0
      %599 = vmatmul.mubr.f32.gmra.mrb[0].mxu0 %v471
      %v600 = vpop.f32.mrb[0].mxu0
      %v601 = vadd.f32 %v443, %v600
      %v602 = vpop.f32.mrb[0].mxu0
      %603 = vmatprep.mubr.f32.mxu0 0.0
      %604 = vmatmul.mubr.f32.gmra.mrb[0].mxu0 %v474
      %v605 = vpop.f32.mrb[0].mxu0
      %v606 = vadd.f32 %v443, %v605
      %v607 = vpop.f32.mrb[0].mxu0
      %608 = vmatprep.mubr.f32.mxu0 0.0
      %609 = vmatmul.mubr.f32.gmra.mrb[0].mxu0 %v477
      %v610 = vpop.f32.mrb[0].mxu0
      %v611 = vadd.f32 %v443, %v610
      %v612 = vpop.f32.mrb[0].mxu0
      %613 = vmatprep.mubr.f32.mxu0 0.0
      %614 = vmatmul.mubr.f32.gmra.mrb[0].mxu0 %v480
      %v615 = vpop.f32.mrb[0].mxu0
      %v616 = vadd.f32 %v443, %v615
      %v617 = vpop.f32.mrb[0].mxu0
      %618 = vmatprep.mubr.f32.mxu0 0.0
      %619 = vmatmul.mubr.f32.gmra.mrb[0].mxu0 %v483
      %v620 = vpop.f32.mrb[0].mxu0
      %v621 = vadd.f32 %v443, %v620
      %v622 = vpop.f32.mrb[0].mxu0
      %623 = vmatprep.mubr.f32.mxu0 0.0
      %624 = vmatmul.mubr.f32.gmra.mrb[0].mxu0 %v486
      %v625 = vpop.f32.mrb[0].mxu0
      %v626 = vadd.f32 %v443, %v625
      %v627 = vpop.f32.mrb[0].mxu0
      %628 = vmatprep.mubr.f32.mxu0 0.0
      %629 = vmatmul.mubr.f32.gmra.mrb[0].mxu0 %v489
      %v630 = vpop.f32.mrb[0].mxu0
      %v631 = vadd.f32 %v443, %v630
      %v632 = vpop.f32.mrb[0].mxu0
      %633 = vmatprep.mubr.f32.mxu0 0.0
      %634 = vmatmul.mubr.f32.gmra.mrb[0].mxu0 %v492
      %v635 = vpop.f32.mrb[0].mxu0
      %v636 = vadd.f32 %v443, %v635
      %v637 = vpop.f32.mrb[0].mxu0
      %638 = vdwg.mxu0
      %v639 = vmax.f32 %v561, 0.0
      %v640 = vmax.f32 %v566, 0.0
      %v641 = vmax.f32 %v571, 0.0
      %v642 = vmax.f32 %v576, 0.0
      %v643 = vmax.f32 %v581, 0.0
      %v644 = vmax.f32 %v586, 0.0
      %v645 = vmax.f32 %v591, 0.0
      %v646 = vmax.f32 %v596, 0.0
      %v647 = vmax.f32 %v601, 0.0
      %v648 = vmax.f32 %v606, 0.0
      %v649 = vmax.f32 %v611, 0.0
      %v650 = vmax.f32 %v616, 0.0
      %v651 = vmax.f32 %v621, 0.0
      %v652 = vmax.f32 %v626, 0.0
      %v653 = vmax.f32 %v631, 0.0
      %v654 = vmax.f32 %v636, 0.0
      %v655 = vld [vmem:[%s3] sm:$0xff]
      %v656 = vld [vmem:[%s410] sm:$0xff]
      %658 = vset.pattern.permute.xlu0 0
      %659 = vperm.xlu0 %658, %v655
      %v660 = vpop.permute.xlu0 %659
      %v662 = vmul.f32 %v660, %v656
      %v663 = vrot.slane %v662, 4
      %v664 = vadd.f32 %v662, %v663
      %v665 = vrot.slane %v664, 2
      %v666 = vadd.f32 %v664, %v665
      %v667 = vrot.slane %v666, 1
      %v668 = vadd.f32 %v666, %v667
      %s669 = sld [smem:[#allocation5]]
      %v670 = vstv %s669
      %v671 = vadd.f32 %v668, %v670
      %v672 = vld [vmem:[%s406] sm:$0xf]
      %vm673 = vcmp.gt.f32.partialorder %v672, 0.0
      %v674 = vsel %vm673, %v671, -1e+30
      %v675 = vld [vmem:[#allocation2] sm:$0xf]
      %vm676 = vcmask 1043456
      %v677 = vsel %vm676, %v674, -inf
      %678 = vmax.xlane.f32.xlu0 %v677
      %v679 = vpop.xlane.xlu0 %678
      %v680 = vmax.f32 %v675, %v679
      %v681 = vsub.f32 %v675, %v680
      %v682 = vmul.f32 %v681, 1.442695
      %v683 = vpow.pop %v682
      %685 = vset.pattern.permute.xlu0 0
      %686 = vperm.xlu0 %685, %v680
      %v687 = vpop.permute.xlu0 %686
      %v689 = vsub.f32 %v674, %v687
      %v690 = vmul.f32 %v689, 1.442695
      %v691 = vpow.pop %v690
      %v692 = vmul.f32 %v672, %v691
      %v693 = vld [vmem:[#allocation3] sm:$0xf]
      %v694 = vmul.f32 %v683, %v693
      %v695 = vsel %vm676, %v692, 0.0
      %696 = vadd.xlane.f32.xlu0 %v695
      %v697 = vpop.xlane.xlu0 %696
      %v698 = vadd.f32 %v694, %v697
      %vm699 = vcmask 3072
      %700 = vst.msk [vmem:[#allocation3] sm:$0xf] %vm699, %v698
      %v701 = vld [vmem:[#allocation4] sm:$0xf]
      %703 = vset.pattern.permute.xlu0 0
      %704 = vperm.xlu0 %703, %v683
      %v705 = vpop.permute.xlu0 %704
      %v707 = vmul.f32 %v705, %v701
      %708 = vmatprep.subr.mxu0 0.0
      %709 = vmatpush1.msra.mxu0 %v639
      %710 = vmatprep.subr.mxu0 0.0
      %711 = vmatpush1.msra.mxu0 %v640
      %712 = vmatprep.subr.mxu0 0.0
      %713 = vmatpush1.msra.mxu0 %v641
      %714 = vmatprep.subr.mxu0 0.0
      %715 = vmatpush1.msra.mxu0 %v642
      %716 = vmatprep.subr.mxu0 0.0
      %717 = vmatpush1.msra.mxu0 %v643
      %718 = vmatprep.subr.mxu0 0.0
      %719 = vmatpush1.msra.mxu0 %v644
      %720 = vmatprep.subr.mxu0 0.0
      %721 = vmatpush1.msra.mxu0 %v645
      %722 = vmatprep.subr.mxu0 0.0
      %723 = vmatpush1.msra.mxu0 %v646
      %724 = vmatprep.subr.mxu0 0.0
      %725 = vmatpush1.msra.mxu0 %v647
      %726 = vmatprep.subr.mxu0 0.0
      %727 = vmatpush1.msra.mxu0 %v648
      %728 = vmatprep.subr.mxu0 0.0
      %729 = vmatpush1.msra.mxu0 %v649
      %730 = vmatprep.subr.mxu0 0.0
      %731 = vmatpush1.msra.mxu0 %v650
      %732 = vmatprep.subr.mxu0 0.0
      %733 = vmatpush1.msra.mxu0 %v651
      %734 = vmatprep.subr.mxu0 0.0
      %735 = vmatpush1.msra.mxu0 %v652
      %736 = vmatprep.subr.mxu0 0.0
      %737 = vmatpush1.msra.mxu0 %v653
      %738 = vmatprep.subr.mxu0 0.0
      %739 = vmatpush1.msra.mxu0 %v654
      %740 = vmatprep.subr.mxu0 0.0
      %741 = vmatpush1.msra.mxu0 0.0
      %742 = vmatprep.subr.mxu0 0.0
      %743 = vmatpush1.msra.mxu0 0.0
      %744 = vmatprep.subr.mxu0 0.0
      %745 = vmatpush1.msra.mxu0 0.0
      %746 = vmatprep.subr.mxu0 0.0
      %747 = vmatpush1.msra.mxu0 0.0
      %748 = vmatprep.subr.mxu0 0.0
      %749 = vmatpush1.msra.mxu0 0.0
      %750 = vmatprep.subr.mxu0 0.0
      %751 = vmatpush1.msra.mxu0 0.0
      %752 = vmatprep.subr.mxu0 0.0
      %753 = vmatpush1.msra.mxu0 0.0
      %754 = vmatprep.subr.mxu0 0.0
      %755 = vmatpush1.msra.mxu0 0.0
      %756 = vmatprep.subr.mxu0 0.0
      %757 = vmatpush1.msra.mxu0 0.0
      %758 = vmatprep.subr.mxu0 0.0
      %759 = vmatpush1.msra.mxu0 0.0
      %760 = vmatprep.subr.mxu0 0.0
      %761 = vmatpush1.msra.mxu0 0.0
      %762 = vmatprep.subr.mxu0 0.0
      %763 = vmatpush1.msra.mxu0 0.0
      %764 = vmatprep.subr.mxu0 0.0
      %765 = vmatpush1.msra.mxu0 0.0
      %766 = vmatprep.subr.mxu0 0.0
      %767 = vmatpush1.msra.mxu0 0.0
      %768 = vmatprep.subr.mxu0 0.0
      %769 = vmatpush1.msra.mxu0 0.0
      %770 = vmatprep.subr.mxu0 0.0
      %771 = vmatpush1.msra.mxu0 0.0
      %772 = vmatprep.mubr.f32.mxu0 0.0
      %773 = vmatmul.mubr.f32.gmra.mrb[0].mxu0 %v692
      %v774 = vpop.f32.mrb[0].mxu0
      %v775 = vadd.f32 0.0, %v774
      %v776 = vpop.f32.mrb[0].mxu0
      %777 = vdwg.mxu0
      %v778 = vadd.f32 %v707, %v775
      %vm779 = vcmask 519168
      %780 = vst.msk [vmem:[#allocation4] sm:$0xf] %vm779, %v778
      %781 = vst.msk [vmem:[#allocation2] sm:$0xf] %vm699, %v680
      %p782 = scmp.eq.s32.totalorder %s25, 1
      // Predicated region
      $region69: #{appnp_net_forward.7} parent=63 // pred_check
        %p783 = pneg %p782
      $region70: #{appnp_net_forward.7} parent=63 // pred_check_branch
        %785 = sbr.rel (%p783) target = $region72
      $region71: #{appnp_net_forward.7} parent=63 // pred_region
        %v786 = vld [vmem:[#allocation3] sm:$0xf]
        %vm787 = vcmp.gt.f32.partialorder %v786, 0.0
        %v788 = vrcp.pop %v786
        %v789 = vmul.f32 1.0, %v788
        %v790 = vsel %vm787, %v789, 0.0
        %v791 = vld [vmem:[#allocation4] sm:$0xf]
        %793 = vset.pattern.permute.xlu0 0
        %794 = vperm.xlu0 %793, %v790
        %v795 = vpop.permute.xlu0 %794
        %v797 = vmul.f32 %v791, %v795
        %v798 = vld [vmem:[%s7] sm:$0xff]
        %v799 = vld [vmem:[%s7 + $0x8] sm:$0xff]
        %v800 = vld [vmem:[%s7 + $0x10] sm:$0xff]
        %v801 = vld [vmem:[%s7 + $0x18] sm:$0xff]
        %v802 = vld [vmem:[%s7 + $0x20] sm:$0xff]
        %v803 = vld [vmem:[%s7 + $0x28] sm:$0xff]
        %v804 = vld [vmem:[%s7 + $0x30] sm:$0xff]
        %v805 = vld [vmem:[%s7 + $0x38] sm:$0xff]
        %v806 = vld [vmem:[%s8] sm:$0x1]
        %v808 = vlaneseq
        %v809 = vshrl.u32 %v808, 7
        %v810 = vsub.s32 0, %v809
        %v811 = vrot.slane %v806, %v810
        %vm813 = vcmask 523264
        %v815 = vsel %vm813, %v797, 0
        %817 = vmatprep.subr.mxu0 0.0
        %818 = vmatpush1.msra.mxu0 %v798
        %819 = vmatprep.subr.mxu0 0.0
        %820 = vmatpush1.msra.mxu0 %v799
        %821 = vmatprep.subr.mxu0 0.0
        %822 = vmatpush1.msra.mxu0 %v800
        %823 = vmatprep.subr.mxu0 0.0
        %824 = vmatpush1.msra.mxu0 %v801
        %825 = vmatprep.subr.mxu0 0.0
        %826 = vmatpush1.msra.mxu0 %v802
        %827 = vmatprep.subr.mxu0 0.0
        %828 = vmatpush1.msra.mxu0 %v803
        %829 = vmatprep.subr.mxu0 0.0
        %830 = vmatpush1.msra.mxu0 %v804
        %831 = vmatprep.subr.mxu0 0.0
        %832 = vmatpush1.msra.mxu0 %v805
        %833 = vmatprep.subr.mxu0 0.0
        %834 = vmatpush1.msra.mxu0 0.0
        %835 = vmatprep.subr.mxu0 0.0
        %836 = vmatpush1.msra.mxu0 0.0
        %837 = vmatprep.subr.mxu0 0.0
        %838 = vmatpush1.msra.mxu0 0.0
        %839 = vmatprep.subr.mxu0 0.0
        %840 = vmatpush1.msra.mxu0 0.0
        %841 = vmatprep.subr.mxu0 0.0
        %842 = vmatpush1.msra.mxu0 0.0
        %843 = vmatprep.subr.mxu0 0.0
        %844 = vmatpush1.msra.mxu0 0.0
        %845 = vmatprep.subr.mxu0 0.0
        %846 = vmatpush1.msra.mxu0 0.0
        %847 = vmatprep.subr.mxu0 0.0
        %848 = vmatpush1.msra.mxu0 0.0
        %849 = vmatprep.subr.mxu0 0.0
        %850 = vmatpush1.msra.mxu0 0.0
        %851 = vmatprep.subr.mxu0 0.0
        %852 = vmatpush1.msra.mxu0 0.0
        %853 = vmatprep.subr.mxu0 0.0
        %854 = vmatpush1.msra.mxu0 0.0
        %855 = vmatprep.subr.mxu0 0.0
        %856 = vmatpush1.msra.mxu0 0.0
        %857 = vmatprep.subr.mxu0 0.0
        %858 = vmatpush1.msra.mxu0 0.0
        %859 = vmatprep.subr.mxu0 0.0
        %860 = vmatpush1.msra.mxu0 0.0
        %861 = vmatprep.subr.mxu0 0.0
        %862 = vmatpush1.msra.mxu0 0.0
        %863 = vmatprep.subr.mxu0 0.0
        %864 = vmatpush1.msra.mxu0 0.0
        %865 = vmatprep.subr.mxu0 0.0
        %866 = vmatpush1.msra.mxu0 0.0
        %867 = vmatprep.subr.mxu0 0.0
        %868 = vmatpush1.msra.mxu0 0.0
        %869 = vmatprep.subr.mxu0 0.0
        %870 = vmatpush1.msra.mxu0 0.0
        %871 = vmatprep.subr.mxu0 0.0
        %872 = vmatpush1.msra.mxu0 0.0
        %873 = vmatprep.subr.mxu0 0.0
        %874 = vmatpush1.msra.mxu0 0.0
        %875 = vmatprep.subr.mxu0 0.0
        %876 = vmatpush1.msra.mxu0 0.0
        %877 = vmatprep.subr.mxu0 0.0
        %878 = vmatpush1.msra.mxu0 0.0
        %879 = vmatprep.subr.mxu0 0.0
        %880 = vmatpush1.msra.mxu0 0.0
        %881 = vmatprep.mubr.f32.mxu0 0.0
        %882 = vmatmul.mubr.f32.gmra.mrb[0].mxu0 %v815
        %v883 = vpop.f32.mrb[0].mxu0
        %v884 = vadd.f32 %v811, %v883
        %v885 = vpop.f32.mrb[0].mxu0
        %886 = vdwg.mxu0
        %v887 = vmax.f32 %v884, 0.0
        %v888 = vld [vmem:[%s9] sm:$0xff]
        %v889 = vld [vmem:[%s9 + $0x8] sm:$0xff]
        %v890 = vld [vmem:[#allocation6] sm:$0x1]
        %v892 = vlaneseq
        %v893 = vshrl.u32 %v892, 7
        %v894 = vsub.s32 0, %v893
        %v895 = vrot.slane %v890, %v894
        %v898 = vsel %vm445, %v887, 0
        %900 = vmatprep.subr.mxu0 0.0
        %901 = vmatpush1.msra.mxu0 %v888
        %902 = vmatprep.subr.mxu0 0.0
        %903 = vmatpush1.msra.mxu0 %v889
        %904 = vmatprep.subr.mxu0 0.0
        %905 = vmatpush1.msra.mxu0 0.0
        %906 = vmatprep.subr.mxu0 0.0
        %907 = vmatpush1.msra.mxu0 0.0
        %908 = vmatprep.subr.mxu0 0.0
        %909 = vmatpush1.msra.mxu0 0.0
        %910 = vmatprep.subr.mxu0 0.0
        %911 = vmatpush1.msra.mxu0 0.0
        %912 = vmatprep.subr.mxu0 0.0
        %913 = vmatpush1.msra.mxu0 0.0
        %914 = vmatprep.subr.mxu0 0.0
        %915 = vmatpush1.msra.mxu0 0.0
        %916 = vmatprep.subr.mxu0 0.0
        %917 = vmatpush1.msra.mxu0 0.0
        %918 = vmatprep.subr.mxu0 0.0
        %919 = vmatpush1.msra.mxu0 0.0
        %920 = vmatprep.subr.mxu0 0.0
        %921 = vmatpush1.msra.mxu0 0.0
        %922 = vmatprep.subr.mxu0 0.0
        %923 = vmatpush1.msra.mxu0 0.0
        %924 = vmatprep.subr.mxu0 0.0
        %925 = vmatpush1.msra.mxu0 0.0
        %926 = vmatprep.subr.mxu0 0.0
        %927 = vmatpush1.msra.mxu0 0.0
        %928 = vmatprep.subr.mxu0 0.0
        %929 = vmatpush1.msra.mxu0 0.0
        %930 = vmatprep.subr.mxu0 0.0
        %931 = vmatpush1.msra.mxu0 0.0
        %932 = vmatprep.subr.mxu0 0.0
        %933 = vmatpush1.msra.mxu0 0.0
        %934 = vmatprep.subr.mxu0 0.0
        %935 = vmatpush1.msra.mxu0 0.0
        %936 = vmatprep.subr.mxu0 0.0
        %937 = vmatpush1.msra.mxu0 0.0
        %938 = vmatprep.subr.mxu0 0.0
        %939 = vmatpush1.msra.mxu0 0.0
        %940 = vmatprep.subr.mxu0 0.0
        %941 = vmatpush1.msra.mxu0 0.0
        %942 = vmatprep.subr.mxu0 0.0
        %943 = vmatpush1.msra.mxu0 0.0
        %944 = vmatprep.subr.mxu0 0.0
        %945 = vmatpush1.msra.mxu0 0.0
        %946 = vmatprep.subr.mxu0 0.0
        %947 = vmatpush1.msra.mxu0 0.0
        %948 = vmatprep.subr.mxu0 0.0
        %949 = vmatpush1.msra.mxu0 0.0
        %950 = vmatprep.subr.mxu0 0.0
        %951 = vmatpush1.msra.mxu0 0.0
        %952 = vmatprep.subr.mxu0 0.0
        %953 = vmatpush1.msra.mxu0 0.0
        %954 = vmatprep.subr.mxu0 0.0
        %955 = vmatpush1.msra.mxu0 0.0
        %956 = vmatprep.subr.mxu0 0.0
        %957 = vmatpush1.msra.mxu0 0.0
        %958 = vmatprep.subr.mxu0 0.0
        %959 = vmatpush1.msra.mxu0 0.0
        %960 = vmatprep.subr.mxu0 0.0
        %961 = vmatpush1.msra.mxu0 0.0
        %962 = vmatprep.subr.mxu0 0.0
        %963 = vmatpush1.msra.mxu0 0.0
        %964 = vmatprep.mubr.f32.mxu0 0.0
        %965 = vmatmul.mubr.f32.gmra.mrb[0].mxu0 %v898
        %v966 = vpop.f32.mrb[0].mxu0
        %v967 = vadd.f32 %v895, %v966
        %v968 = vpop.f32.mrb[0].mxu0
        %969 = vdwg.mxu0
        %970 = vst.msk [vmem:[%s11] sm:$0xf] %vm699, %v967
      $region72: #{appnp_net_forward.7} parent=63 // pred_fallthru
        _
      // Predicated region
      $region73: #{appnp_net_forward.7} parent=63 // pred_check
        %p971 = pneg %p284
      $region74: #{appnp_net_forward.7} parent=63 // pred_check_branch
        %973 = sbr.rel (%p971) target = $region76
      $region75: #{appnp_net_forward.7} parent=63 // pred_region
        _
      $region76: #{appnp_net_forward.7} parent=63 // pred_fallthru
        _
      // Predicated region
      $region77: #{appnp_net_forward.7} parent=63 // pred_check
        %p974 = pneg %p284
      $region78: #{appnp_net_forward.7} parent=63 // pred_check_branch
        %976 = sbr.rel (%p974) target = $region80
      $region79: #{appnp_net_forward.7} parent=63 // pred_region
        _
      $region80: #{appnp_net_forward.7} parent=63 // pred_fallthru
        _
    $region64: #{appnp_net_forward.7} parent=5 // pred_fallthru
      _
    %p977 = scmp.le.s32.totalorder 2, %s20
    // Predicated region
    $region81: #{appnp_net_forward.7} parent=5 // pred_check
      %p978 = pneg %p977
    $region82: #{appnp_net_forward.7} parent=5 // pred_check_branch
      %980 = sbr.rel (%p978) target = $region84
    $region83: #{appnp_net_forward.7} parent=5 // pred_region
      %s981 = ssub.s32 %s20, 2
    $region84: #{appnp_net_forward.7} parent=5 // pred_fallthru
      _
  $region6: #{appnp_net_forward.7} parent=0 // loop_footer
    %s24 = sadd.s32 1, %s20
  $region7: #{appnp_net_forward.7} parent=0 // loop_footer_branch
    %19 = sbr.rel target = $region3
  $region8: #{appnp_net_forward.7} parent=0 // loop_exit
    _

// kernel: appnp_net_forward.4
$region0: #{appnp_net_forward.4}
  #allocation0 [shape = 'u32[]', space=smem, size = 0x4, offset = 0x4, fixed_abs, tag = 'smem constant byte address 0x4 - core index']
  #allocation1 [shape = 'u32[144,128]{1,0:T(1,128)}', space=vmem, size = 0x12000, scoped, tag = 'internal scratch']
  #allocation2 [shape = 'f32[128,16]{1,0:T(8,128)}', space=vmem, size = 0x10000, scoped, tag = 'scratch operand']
  %s0 = inlined_call_operand.vmem [shape: bf16[256,256], index: 0, kind: input, shape index: {}]
  %s1 = inlined_call_operand.vmem [shape: f32[256,16], index: 1, kind: input, shape index: {}, may-alias: {1,2}]
  %s2 = inlined_call_operand.vmem [shape: f32[256,16], index: 2, kind: input, shape index: {}, may-alias: {1,2}]
  %s3 = inlined_call_operand.vmem [shape: f32[256,16], index: 3, kind: output, shape index: {}]
  %s4 = sld [smem:[#allocation0]]
  $region94: #{appnp_net_forward.4} parent=0
    _
  %s6 = ssub.s32 1, %s4
  %s7 = scalar_select 0, %s6, %s4
  $region1: #{appnp_net_forward.4} parent=0
    #allocation3 [shape = 'u8[65536]{0}', space=vmem, size = 0x10000, scoped, tag = 'input window, operand 0']
    loop: start=0, step=1, limit=6
    $region2: #{appnp_net_forward.4} parent=1 // loop_pre_header
      _
    $region3: #{appnp_net_forward.4} parent=1 // loop_header
      %s9 = sphi 0, %s13
      %p10 = scmp.ge.s32.totalorder %s9, 6
      %s16 = sphi 0, %s28
      %s17 = sphi 0, %s24
      %s18 = sphi 0, %s16
      %s19 = sphi 0, %s17
      %s20 = sphi 0, %s18
      %s21 = sphi 0, %s19
      %s33 = sphi 0, %s35
      %s36 = sphi 0, %s33
      %s37 = sphi 0, %s36
      %s53 = sphi 0, %s37
      %s59 = sphi 0, %s61
      %s62 = sphi 0, %s59
      %s63 = sphi 0, %s62
      %s79 = sphi 0, %s63
      %s85 = sphi 0, %s87
      %s88 = sphi 0, %s85
      %s89 = sphi 0, %s88
      %s105 = sphi 0, %s89
      %s111 = sphi 0, %s113
      %s114 = sphi 0, %s111
      %s115 = sphi 0, %s114
      %s131 = sphi 0, %s115
    $region4: #{appnp_net_forward.4} parent=1 // loop_header_branch
      %12 = sbr.rel (%p10) target = $region8
    $region5: #{appnp_net_forward.4} parent=1 // loop_body
      %s14 = ssub.s32 %s9, 1
      %s15 = ssub.s32 %s9, 2
      %s22 = sadd.s32 1, %s17
      %p23 = scmp.ge.s32.totalorder %s22, 2
      %s24 = scalar_select %p23, 0, %s22
      %s25 = sadd.s32 1, %s16
      %s26 = scalar_select %p23, %s25, %s16
      %p27 = scmp.ge.s32.totalorder %s26, 2
      %s28 = scalar_select %p27, 0, %s26
      %s29 = ssub.s32 %s16, %s28
      %s30 = ssub.s32 %s17, %s24
      %s31 = sor.u32 %s29, %s30
      %p32 = scmp.eq.s32.totalorder %s31, 0
      %s34 = sadd.s32 %s33, 1
      %s35 = scalar_select %p32, %s33, %s34
      %p38 = pneg %p32
      %p39 = scmp.eq.s32.totalorder %s9, 3
      %p40 = por %p38, %p39
      %p41 = scmp.ne.s32.totalorder %s33, %s36
      %p42 = scmp.eq.s32.totalorder %s9, 0
      %p43 = por %p41, %p42
      %p44 = scmp.ne.s32.totalorder %s33, %s36
      %p45 = scmp.eq.s32.totalorder %s14, 3
      %p46 = por %p44, %p45
      %p47 = scmp.ne.s32.totalorder %s36, %s37
      %p48 = scmp.eq.s32.totalorder %s14, 0
      %p49 = por %p47, %p48
      %p50 = scmp.ne.s32.totalorder %s36, %s37
      %p51 = scmp.eq.s32.totalorder %s15, 3
      %p52 = por %p50, %p51
      %p54 = scmp.ne.s32.totalorder %s37, %s53
      %p55 = scmp.eq.s32.totalorder %s15, 0
      %p56 = por %p54, %p55
      %s57 = ssub.s32 %s17, %s24
      %p58 = scmp.eq.s32.totalorder %s57, 0
      %s60 = sadd.s32 %s59, 1
      %s61 = scalar_select %p58, %s59, %s60
      %p64 = pneg %p58
      %p65 = scmp.eq.s32.totalorder %s9, 3
      %p66 = por %p64, %p65
      %p67 = scmp.ne.s32.totalorder %s59, %s62
      %p68 = scmp.eq.s32.totalorder %s9, 0
      %p69 = por %p67, %p68
      %p70 = scmp.ne.s32.totalorder %s59, %s62
      %p71 = scmp.eq.s32.totalorder %s14, 3
      %p72 = por %p70, %p71
      %p73 = scmp.ne.s32.totalorder %s62, %s63
      %p74 = scmp.eq.s32.totalorder %s14, 0
      %p75 = por %p73, %p74
      %p76 = scmp.ne.s32.totalorder %s62, %s63
      %p77 = scmp.eq.s32.totalorder %s15, 3
      %p78 = por %p76, %p77
      %p80 = scmp.ne.s32.totalorder %s63, %s79
      %p81 = scmp.eq.s32.totalorder %s15, 0
      %p82 = por %p80, %p81
      %s83 = ssub.s32 %s16, %s28
      %p84 = scmp.eq.s32.totalorder %s83, 0
      %s86 = sadd.s32 %s85, 1
      %s87 = scalar_select %p84, %s85, %s86
      %p90 = pneg %p84
      %p91 = scmp.eq.s32.totalorder %s9, 3
      %p92 = por %p90, %p91
      %p93 = scmp.ne.s32.totalorder %s85, %s88
      %p94 = scmp.eq.s32.totalorder %s9, 0
      %p95 = por %p93, %p94
      %p96 = scmp.ne.s32.totalorder %s85, %s88
      %p97 = scmp.eq.s32.totalorder %s14, 3
      %p98 = por %p96, %p97
      %p99 = scmp.ne.s32.totalorder %s88, %s89
      %p100 = scmp.eq.s32.totalorder %s14, 0
      %p101 = por %p99, %p100
      %p102 = scmp.ne.s32.totalorder %s88, %s89
      %p103 = scmp.eq.s32.totalorder %s15, 3
      %p104 = por %p102, %p103
      %p106 = scmp.ne.s32.totalorder %s89, %s105
      %p107 = scmp.eq.s32.totalorder %s15, 0
      %p108 = por %p106, %p107
      %s109 = ssub.s32 %s16, %s28
      %p110 = scmp.eq.s32.totalorder %s109, 0
      %s112 = sadd.s32 %s111, 1
      %s113 = scalar_select %p110, %s111, %s112
      %p116 = pneg %p110
      %p117 = scmp.eq.s32.totalorder %s9, 3
      %p118 = por %p116, %p117
      %p119 = scmp.ne.s32.totalorder %s111, %s114
      %p120 = scmp.eq.s32.totalorder %s9, 0
      %p121 = por %p119, %p120
      %p122 = scmp.ne.s32.totalorder %s111, %s114
      %p123 = scmp.eq.s32.totalorder %s14, 3
      %p124 = por %p122, %p123
      %p125 = scmp.ne.s32.totalorder %s114, %s115
      %p126 = scmp.eq.s32.totalorder %s14, 0
      %p127 = por %p125, %p126
      %p128 = scmp.ne.s32.totalorder %s114, %s115
      %p129 = scmp.eq.s32.totalorder %s15, 3
      %p130 = por %p128, %p129
      %p132 = scmp.ne.s32.totalorder %s115, %s131
      %p133 = scmp.eq.s32.totalorder %s15, 0
      %p134 = por %p132, %p133
      %p135 = scmp.le.s32.totalorder 1, %s9
      %p136 = scmp.lt.s32.totalorder %s9, 5
      %p137 = pnand %p135, %p136
      %p138 = pneg %p137
      // Predicated region
      $region9: #{appnp_net_forward.4} parent=5 // pred_check
        _
      $region10: #{appnp_net_forward.4} parent=5 // pred_check_branch
        %140 = sbr.rel (%p137) target = $region12
      $region11: #{appnp_net_forward.4} parent=5 // pred_region
        %s141 = ssub.s32 %s9, 1
      $region12: #{appnp_net_forward.4} parent=5 // pred_fallthru
        _
      %p142 = scmp.lt.s32.totalorder %s9, 4
      // Predicated region
      $region13: #{appnp_net_forward.4} parent=5 // pred_check
        %p143 = pneg %p142
      $region14: #{appnp_net_forward.4} parent=5 // pred_check_branch
        %145 = sbr.rel (%p143) target = $region16
      $region15: #{appnp_net_forward.4} parent=5 // pred_region
        // Predicated region
        $region17: #{appnp_net_forward.4} parent=15 // pred_check
          %p146 = pneg %p43
        $region18: #{appnp_net_forward.4} parent=15 // pred_check_branch
          %148 = sbr.rel (%p146) target = $region20
        $region19: #{appnp_net_forward.4} parent=15 // pred_region
          %s149 = sand.u32 %s33, 1
          %s150 = sand.u32 %s33, 1
          %s151 = smul.addr %s150, 64
          %s152 = scalar_lea.vmem [#allocation3], %s151
          %s153 = smul.u32 16, %s16
          %s154 = smul.addr %s153, 2
          %s155 = sadd.s32 %s17, %s154
          %s156 = smul.addr %s155, 4
          %s157 = scalar_lea.vmem %s0, %s156
          // Predicated region
          $region21: #{appnp_net_forward.4} parent=19 // pred_check
            _
          $region22: #{appnp_net_forward.4} parent=19 // pred_check_branch
            %159 = sbr.rel (0) target = $region24
          $region23: #{appnp_net_forward.4} parent=19 // pred_region
            // Predicated region
            $region25: #{appnp_net_forward.4} parent=23 // pred_check
              _
            $region26: #{appnp_net_forward.4} parent=23 // pred_check_branch
              %161 = sbr.rel target = $region28
            $region27: #{appnp_net_forward.4} parent=23 // pred_region
              // Predicated region
              $region40: #{appnp_net_forward.4} parent=27 // pred_check
                _
              $region41: #{appnp_net_forward.4} parent=27 // pred_check_branch
                %206 = sbr.rel (0) target = $region43
              $region42: #{appnp_net_forward.4} parent=27 // pred_region
                loop: start=0, step=1, limit=1
                $region44: #{appnp_net_forward.4} parent=42 // loop_pre_header
                  _
                $region45: #{appnp_net_forward.4} parent=42 // loop_header
                  %s208 = sphi 0, %s212
                  %p209 = scmp.ge.s32.totalorder %s208, 1
                  %s213 = sphi %s157, %s157
                  %s214 = sphi %s152, %s152
                $region46: #{appnp_net_forward.4} parent=42 // loop_header_branch
                  %211 = sbr.rel (%p209) target = $region50
                $region47: #{appnp_net_forward.4} parent=42 // loop_body
                  _
                $region48: #{appnp_net_forward.4} parent=42 // loop_footer
                  %s212 = sadd.s32 1, %s208
                $region49: #{appnp_net_forward.4} parent=42 // loop_footer_branch
                  %207 = sbr.rel target = $region45
                $region50: #{appnp_net_forward.4} parent=42 // loop_exit
                  _
                loop: start=0, step=1, limit=1
                $region51: #{appnp_net_forward.4} parent=42 // loop_pre_header
                  _
                $region52: #{appnp_net_forward.4} parent=42 // loop_header
                  %s217 = sphi 0, %s221
                  %p218 = scmp.ge.s32.totalorder %s217, 1
                  %s222 = sphi %s157, %s157
                  %s223 = sphi %s152, %s152
                $region53: #{appnp_net_forward.4} parent=42 // loop_header_branch
                  %220 = sbr.rel (%p218) target = $region57
                $region54: #{appnp_net_forward.4} parent=42 // loop_body
                  %v224 = vld [vmem:[%s222] sm:$0xf]
                  %225 = vst [vmem:[%s223] sm:$0xf] %v224
                  %v226 = vld [vmem:[%s222 + $0x8] sm:$0xf]
                  %227 = vst [vmem:[%s223 + $0x4] sm:$0xf] %v226
                  %v228 = vld [vmem:[%s222 + $0x10] sm:$0xf]
                  %229 = vst [vmem:[%s223 + $0x8] sm:$0xf] %v228
                  %v230 = vld [vmem:[%s222 + $0x18] sm:$0xf]
                  %231 = vst [vmem:[%s223 + $0xc] sm:$0xf] %v230
                  %v232 = vld [vmem:[%s222 + $0x20] sm:$0xf]
                  %233 = vst [vmem:[%s223 + $0x10] sm:$0xf] %v232
                  %v234 = vld [vmem:[%s222 + $0x28] sm:$0xf]
                  %235 = vst [vmem:[%s223 + $0x14] sm:$0xf] %v234
                  %v236 = vld [vmem:[%s222 + $0x30] sm:$0xf]
                  %237 = vst [vmem:[%s223 + $0x18] sm:$0xf] %v236
                  %v238 = vld [vmem:[%s222 + $0x38] sm:$0xf]
                  %239 = vst [vmem:[%s223 + $0x1c] sm:$0xf] %v238
                  %v240 = vld [vmem:[%s222 + $0x40] sm:$0xf]
                  %241 = vst [vmem:[%s223 + $0x20] sm:$0xf] %v240
                  %v242 = vld [vmem:[%s222 + $0x48] sm:$0xf]
                  %243 = vst [vmem:[%s223 + $0x24] sm:$0xf] %v242
                  %v244 = vld [vmem:[%s222 + $0x50] sm:$0xf]
                  %245 = vst [vmem:[%s223 + $0x28] sm:$0xf] %v244
                  %v246 = vld [vmem:[%s222 + $0x58] sm:$0xf]
                  %247 = vst [vmem:[%s223 + $0x2c] sm:$0xf] %v246
                  %v248 = vld [vmem:[%s222 + $0x60] sm:$0xf]
                  %249 = vst [vmem:[%s223 + $0x30] sm:$0xf] %v248
                  %v250 = vld [vmem:[%s222 + $0x68] sm:$0xf]
                  %251 = vst [vmem:[%s223 + $0x34] sm:$0xf] %v250
                  %v252 = vld [vmem:[%s222 + $0x70] sm:$0xf]
                  %253 = vst [vmem:[%s223 + $0x38] sm:$0xf] %v252
                  %v254 = vld [vmem:[%s222 + $0x78] sm:$0xf]
                  %255 = vst [vmem:[%s223 + $0x3c] sm:$0xf] %v254
                $region55: #{appnp_net_forward.4} parent=42 // loop_footer
                  %s221 = sadd.s32 1, %s217
                $region56: #{appnp_net_forward.4} parent=42 // loop_footer_branch
                  %216 = sbr.rel target = $region52
                $region57: #{appnp_net_forward.4} parent=42 // loop_exit
                  _
              $region43: #{appnp_net_forward.4} parent=27 // pred_fallthru
                _
            $region28: #{appnp_net_forward.4} parent=23 // pred_fallthru
              _
            // Predicated region
            $region29: #{appnp_net_forward.4} parent=23 // pred_check
              _
            $region30: #{appnp_net_forward.4} parent=23 // pred_check_branch
              %163 = sbr.rel (0) target = $region32
            $region31: #{appnp_net_forward.4} parent=23 // pred_region
              loop: start=0, step=1, limit=1
              $region33: #{appnp_net_forward.4} parent=31 // loop_pre_header
                _
              $region34: #{appnp_net_forward.4} parent=31 // loop_header
                %s166 = sphi 0, %s170
                %p167 = scmp.ge.s32.totalorder %s166, 1
                %s171 = sphi %s157, %s157
                %s172 = sphi %s152, %s152
              $region35: #{appnp_net_forward.4} parent=31 // loop_header_branch
                %169 = sbr.rel (%p167) target = $region39
              $region36: #{appnp_net_forward.4} parent=31 // loop_body
                %v173 = vld [vmem:[%s171] sm:$0xf]
                %174 = vst [vmem:[%s172] sm:$0xf] %v173
                %v175 = vld [vmem:[%s171 + $0x8] sm:$0xf]
                %176 = vst [vmem:[%s172 + $0x4] sm:$0xf] %v175
                %v177 = vld [vmem:[%s171 + $0x10] sm:$0xf]
                %178 = vst [vmem:[%s172 + $0x8] sm:$0xf] %v177
                %v179 = vld [vmem:[%s171 + $0x18] sm:$0xf]
                %180 = vst [vmem:[%s172 + $0xc] sm:$0xf] %v179
                %v181 = vld [vmem:[%s171 + $0x20] sm:$0xf]
                %182 = vst [vmem:[%s172 + $0x10] sm:$0xf] %v181
                %v183 = vld [vmem:[%s171 + $0x28] sm:$0xf]
                %184 = vst [vmem:[%s172 + $0x14] sm:$0xf] %v183
                %v185 = vld [vmem:[%s171 + $0x30] sm:$0xf]
                %186 = vst [vmem:[%s172 + $0x18] sm:$0xf] %v185
                %v187 = vld [vmem:[%s171 + $0x38] sm:$0xf]
                %188 = vst [vmem:[%s172 + $0x1c] sm:$0xf] %v187
                %v189 = vld [vmem:[%s171 + $0x40] sm:$0xf]
                %190 = vst [vmem:[%s172 + $0x20] sm:$0xf] %v189
                %v191 = vld [vmem:[%s171 + $0x48] sm:$0xf]
                %192 = vst [vmem:[%s172 + $0x24] sm:$0xf] %v191
                %v193 = vld [vmem:[%s171 + $0x50] sm:$0xf]
                %194 = vst [vmem:[%s172 + $0x28] sm:$0xf] %v193
                %v195 = vld [vmem:[%s171 + $0x58] sm:$0xf]
                %196 = vst [vmem:[%s172 + $0x2c] sm:$0xf] %v195
                %v197 = vld [vmem:[%s171 + $0x60] sm:$0xf]
                %198 = vst [vmem:[%s172 + $0x30] sm:$0xf] %v197
                %v199 = vld [vmem:[%s171 + $0x68] sm:$0xf]
                %200 = vst [vmem:[%s172 + $0x34] sm:$0xf] %v199
                %v201 = vld [vmem:[%s171 + $0x70] sm:$0xf]
                %202 = vst [vmem:[%s172 + $0x38] sm:$0xf] %v201
                %v203 = vld [vmem:[%s171 + $0x78] sm:$0xf]
                %204 = vst [vmem:[%s172 + $0x3c] sm:$0xf] %v203
              $region37: #{appnp_net_forward.4} parent=31 // loop_footer
                %s170 = sadd.s32 1, %s166
              $region38: #{appnp_net_forward.4} parent=31 // loop_footer_branch
                %165 = sbr.rel target = $region34
              $region39: #{appnp_net_forward.4} parent=31 // loop_exit
                _
            $region32: #{appnp_net_forward.4} parent=23 // pred_fallthru
              _
          $region24: #{appnp_net_forward.4} parent=19 // pred_fallthru
            _
          %256 = vnop
        $region20: #{appnp_net_forward.4} parent=15 // pred_fallthru
          _
        // Predicated region
        $region58: #{appnp_net_forward.4} parent=15 // pred_check
          %p257 = pneg %p69
        $region59: #{appnp_net_forward.4} parent=15 // pred_check_branch
          %259 = sbr.rel (%p257) target = $region61
        $region60: #{appnp_net_forward.4} parent=15 // pred_region
          %s260 = smul.u32 16, %s17
          %p261 = scmp.lt.s32.totalorder %s260, 31
          %s262 = scalar_select %p261, %s260, 31
          %s263 = smul.addr %s262, 8
          %s264 = scalar_lea.vmem %s1, %s263
          %s265 = smul.u32 16, %s17
        $region61: #{appnp_net_forward.4} parent=15 // pred_fallthru
          _
        // Predicated region
        $region62: #{appnp_net_forward.4} parent=15 // pred_check
          %p266 = pneg %p95
        $region63: #{appnp_net_forward.4} parent=15 // pred_check_branch
          %268 = sbr.rel (%p266) target = $region65
        $region64: #{appnp_net_forward.4} parent=15 // pred_region
          %s269 = smul.u32 16, %s16
          %p270 = scmp.lt.s32.totalorder %s269, 31
          %s271 = scalar_select %p270, %s269, 31
          %s272 = smul.addr %s271, 8
          %s273 = scalar_lea.vmem %s2, %s272
          %s274 = smul.u32 16, %s16
        $region65: #{appnp_net_forward.4} parent=15 // pred_fallthru
          _
      $region16: #{appnp_net_forward.4} parent=5 // pred_fallthru
        _
      %p275 = scmp.le.s32.totalorder 1, %s9
      %p276 = scmp.lt.s32.totalorder %s9, 5
      %p277 = pnand %p275, %p276
      %p278 = pneg %p277
      // Predicated region
      $region66: #{appnp_net_forward.4} parent=5 // pred_check
        _
      $region67: #{appnp_net_forward.4} parent=5 // pred_check_branch
        %280 = sbr.rel (%p277) target = $region69
      $region68: #{appnp_net_forward.4} parent=5 // pred_region
        %s281 = ssub.s32 %s9, 1
        %s282 = sand.u32 %s36, 1
        %s283 = sand.u32 %s36, 1
        %s284 = smul.addr %s283, 64
        %s285 = scalar_lea.vmem [#allocation3], %s284
        // Predicated region
        $region70: #{appnp_net_forward.4} parent=68 // pred_check
          %p286 = pneg %p49
        $region71: #{appnp_net_forward.4} parent=68 // pred_check_branch
          %288 = sbr.rel (%p286) target = $region73
        $region72: #{appnp_net_forward.4} parent=68 // pred_region
          _
        $region73: #{appnp_net_forward.4} parent=68 // pred_fallthru
          _
        %s289 = sand.u32 %s36, 1
        %s290 = sand.u32 %s36, 1
        %s291 = smul.addr %s290, 64
        %s292 = scalar_lea.vmem [#allocation3], %s291
        %p293 = pneg %p49
        %p294 = pneg %p46
        %s295 = smul.u32 16, %s19
        %p296 = scmp.lt.s32.totalorder %s295, 31
        %s297 = scalar_select %p296, %s295, 31
        %s298 = smul.addr %s297, 8
        %s299 = scalar_lea.vmem %s1, %s298
        %p300 = pneg %p75
        %p301 = pneg %p72
        %s302 = smul.u32 16, %s18
        %p303 = scmp.lt.s32.totalorder %s302, 31
        %s304 = scalar_select %p303, %s302, 31
        %s305 = smul.addr %s304, 8
        %s306 = scalar_lea.vmem %s2, %s305
        %p307 = pneg %p101
        %p308 = pneg %p98
        %p309 = pneg %p127
        %p310 = pneg %p124
        %s311 = smul.u32 16, %s18
        %p312 = scmp.lt.s32.totalorder %s311, 31
        %s313 = scalar_select %p312, %s311, 31
        %s314 = smul.addr %s313, 8
        %s315 = scalar_lea.vmem %s3, %s314
        %s316 = smul.u32 16, %s18
        %s317 = smul.u32 16, %s19
        %p318 = scmp.lt.s32.totalorder %s317, 31
        %s319 = scalar_select %p318, %s317, 31
        %s320 = smul.addr %s319, 8
        %s321 = scalar_lea.vmem %s1, %s320
        %s322 = smul.u32 16, %s19
        %s323 = smul.u32 16, %s18
        %p324 = scmp.lt.s32.totalorder %s323, 31
        %s325 = scalar_select %p324, %s323, 31
        %s326 = smul.addr %s325, 8
        %s327 = scalar_lea.vmem %s2, %s326
        %s328 = smul.u32 16, %s18
        %s329 = smul.u32 16, %s18
        %p330 = scmp.lt.s32.totalorder %s329, 31
        %s331 = scalar_select %p330, %s329, 31
        %s332 = smul.addr %s331, 8
        %s333 = scalar_lea.vmem %s3, %s332
        %s334 = smul.u32 16, %s18
        %p335 = scmp.eq.s32.totalorder %s19, 0
        // Predicated region
        $region74: #{appnp_net_forward.4} parent=68 // pred_check
          %p336 = pneg %p335
        $region75: #{appnp_net_forward.4} parent=68 // pred_check_branch
          %338 = sbr.rel (%p336) target = $region77
        $region76: #{appnp_net_forward.4} parent=68 // pred_region
          %vm339 = vcmask 130048
          %340 = vst.msk [vmem:[#allocation2] sm:$0xff] %vm339, 0.0
          %341 = vst.msk [vmem:[#allocation2 + $0x8] sm:$0xff] %vm339, 0.0
          %342 = vst.msk [vmem:[#allocation2 + $0x10] sm:$0xff] %vm339, 0.0
          %343 = vst.msk [vmem:[#allocation2 + $0x18] sm:$0xff] %vm339, 0.0
          %344 = vst.msk [vmem:[#allocation2 + $0x20] sm:$0xff] %vm339, 0.0
          %345 = vst.msk [vmem:[#allocation2 + $0x28] sm:$0xff] %vm339, 0.0
          %346 = vst.msk [vmem:[#allocation2 + $0x30] sm:$0xff] %vm339, 0.0
          %347 = vst.msk [vmem:[#allocation2 + $0x38] sm:$0xff] %vm339, 0.0
          %348 = vst.msk [vmem:[#allocation2 + $0x40] sm:$0xff] %vm339, 0.0
          %349 = vst.msk [vmem:[#allocation2 + $0x48] sm:$0xff] %vm339, 0.0
          %350 = vst.msk [vmem:[#allocation2 + $0x50] sm:$0xff] %vm339, 0.0
          %351 = vst.msk [vmem:[#allocation2 + $0x58] sm:$0xff] %vm339, 0.0
          %352 = vst.msk [vmem:[#allocation2 + $0x60] sm:$0xff] %vm339, 0.0
          %353 = vst.msk [vmem:[#allocation2 + $0x68] sm:$0xff] %vm339, 0.0
          %354 = vst.msk [vmem:[#allocation2 + $0x70] sm:$0xff] %vm339, 0.0
          %355 = vst.msk [vmem:[#allocation2 + $0x78] sm:$0xff] %vm339, 0.0
        $region77: #{appnp_net_forward.4} parent=68 // pred_fallthru
          _
        %v356 = vld [vmem:[#allocation2] sm:$0xff]
        %v357 = vld [vmem:[#allocation2 + $0x8] sm:$0xff]
        %v358 = vld [vmem:[#allocation2 + $0x10] sm:$0xff]
        %v359 = vld [vmem:[#allocation2 + $0x18] sm:$0xff]
        %v360 = vld [vmem:[#allocation2 + $0x20] sm:$0xff]
        %v361 = vld [vmem:[#allocation2 + $0x28] sm:$0xff]
        %v362 = vld [vmem:[#allocation2 + $0x30] sm:$0xff]
        %v363 = vld [vmem:[#allocation2 + $0x38] sm:$0xff]
        %v364 = vld [vmem:[#allocation2 + $0x40] sm:$0xff]
        %v365 = vld [vmem:[#allocation2 + $0x48] sm:$0xff]
        %v366 = vld [vmem:[#allocation2 + $0x50] sm:$0xff]
        %v367 = vld [vmem:[#allocation2 + $0x58] sm:$0xff]
        %v368 = vld [vmem:[#allocation2 + $0x60] sm:$0xff]
        %v369 = vld [vmem:[#allocation2 + $0x68] sm:$0xff]
        %v370 = vld [vmem:[#allocation2 + $0x70] sm:$0xff]
        %v371 = vld [vmem:[#allocation2 + $0x78] sm:$0xff]
        %v372 = vld [vmem:[%s285] sm:$0xf]
        %v373 = vld [vmem:[%s285 + $0x4] sm:$0xf]
        %v374 = vld [vmem:[%s285 + $0x8] sm:$0xf]
        %v375 = vld [vmem:[%s285 + $0xc] sm:$0xf]
        %v376 = vld [vmem:[%s285 + $0x10] sm:$0xf]
        %v377 = vld [vmem:[%s285 + $0x14] sm:$0xf]
        %v378 = vld [vmem:[%s285 + $0x18] sm:$0xf]
        %v379 = vld [vmem:[%s285 + $0x1c] sm:$0xf]
        %v380 = vld [vmem:[%s285 + $0x20] sm:$0xf]
        %v381 = vld [vmem:[%s285 + $0x24] sm:$0xf]
        %v382 = vld [vmem:[%s285 + $0x28] sm:$0xf]
        %v383 = vld [vmem:[%s285 + $0x2c] sm:$0xf]
        %v384 = vld [vmem:[%s285 + $0x30] sm:$0xf]
        %v385 = vld [vmem:[%s285 + $0x34] sm:$0xf]
        %v386 = vld [vmem:[%s285 + $0x38] sm:$0xf]
        %v387 = vld [vmem:[%s285 + $0x3c] sm:$0xf]
        %v388 = vunpack.c.l.bf16 %v372
        %v389 = vunpack.c.l.bf16 %v373
        %v390 = vunpack.c.l.bf16 %v374
        %v391 = vunpack.c.l.bf16 %v375
        %v392 = vunpack.c.l.bf16 %v376
        %v393 = vunpack.c.l.bf16 %v377
        %v394 = vunpack.c.l.bf16 %v378
        %v395 = vunpack.c.l.bf16 %v379
        %v396 = vunpack.c.l.bf16 %v380
        %v397 = vunpack.c.l.bf16 %v381
        %v398 = vunpack.c.l.bf16 %v382
        %v399 = vunpack.c.l.bf16 %v383
        %v400 = vunpack.c.l.bf16 %v384
        %v401 = vunpack.c.l.bf16 %v385
        %v402 = vunpack.c.l.bf16 %v386
        %v403 = vunpack.c.l.bf16 %v387
        %v404 = vld [vmem:[%s321] sm:$0xff]
        %v405 = vld [vmem:[%s321 + $0x8] sm:$0xff]
        %v406 = vld [vmem:[%s321 + $0x10] sm:$0xff]
        %v407 = vld [vmem:[%s321 + $0x18] sm:$0xff]
        %v408 = vld [vmem:[%s321 + $0x20] sm:$0xff]
        %v409 = vld [vmem:[%s321 + $0x28] sm:$0xff]
        %v410 = vld [vmem:[%s321 + $0x30] sm:$0xff]
        %v411 = vld [vmem:[%s321 + $0x38] sm:$0xff]
        %v412 = vld [vmem:[%s321 + $0x40] sm:$0xff]
        %v413 = vld [vmem:[%s321 + $0x48] sm:$0xff]
        %v414 = vld [vmem:[%s321 + $0x50] sm:$0xff]
        %v415 = vld [vmem:[%s321 + $0x58] sm:$0xff]
        %v416 = vld [vmem:[%s321 + $0x60] sm:$0xff]
        %v417 = vld [vmem:[%s321 + $0x68] sm:$0xff]
        %v418 = vld [vmem:[%s321 + $0x70] sm:$0xff]
        %v419 = vld [vmem:[%s321 + $0x78] sm:$0xff]
        %420 = vmatprep.subr.mxu0 0.0
        %421 = vmatpush1.msra.mxu0 %v404
        %422 = vmatprep.subr.mxu0 0.0
        %423 = vmatpush1.msra.mxu0 %v405
        %424 = vmatprep.subr.mxu0 0.0
        %425 = vmatpush1.msra.mxu0 %v406
        %426 = vmatprep.subr.mxu0 0.0
        %427 = vmatpush1.msra.mxu0 %v407
        %428 = vmatprep.subr.mxu0 0.0
        %429 = vmatpush1.msra.mxu0 %v408
        %430 = vmatprep.subr.mxu0 0.0
        %431 = vmatpush1.msra.mxu0 %v409
        %432 = vmatprep.subr.mxu0 0.0
        %433 = vmatpush1.msra.mxu0 %v410
        %434 = vmatprep.subr.mxu0 0.0
        %435 = vmatpush1.msra.mxu0 %v411
        %436 = vmatprep.subr.mxu0 0.0
        %437 = vmatpush1.msra.mxu0 %v412
        %438 = vmatprep.subr.mxu0 0.0
        %439 = vmatpush1.msra.mxu0 %v413
        %440 = vmatprep.subr.mxu0 0.0
        %441 = vmatpush1.msra.mxu0 %v414
        %442 = vmatprep.subr.mxu0 0.0
        %443 = vmatpush1.msra.mxu0 %v415
        %444 = vmatprep.subr.mxu0 0.0
        %445 = vmatpush1.msra.mxu0 %v416
        %446 = vmatprep.subr.mxu0 0.0
        %447 = vmatpush1.msra.mxu0 %v417
        %448 = vmatprep.subr.mxu0 0.0
        %449 = vmatpush1.msra.mxu0 %v418
        %450 = vmatprep.subr.mxu0 0.0
        %451 = vmatpush1.msra.mxu0 %v419
        %452 = vmatprep.subr.mxu0 0.0
        %453 = vmatpush1.msra.mxu0 0.0
        %454 = vmatprep.subr.mxu0 0.0
        %455 = vmatpush1.msra.mxu0 0.0
        %456 = vmatprep.subr.mxu0 0.0
        %457 = vmatpush1.msra.mxu0 0.0
        %458 = vmatprep.subr.mxu0 0.0
        %459 = vmatpush1.msra.mxu0 0.0
        %460 = vmatprep.subr.mxu0 0.0
        %461 = vmatpush1.msra.mxu0 0.0
        %462 = vmatprep.subr.mxu0 0.0
        %463 = vmatpush1.msra.mxu0 0.0
        %464 = vmatprep.subr.mxu0 0.0
        %465 = vmatpush1.msra.mxu0 0.0
        %466 = vmatprep.subr.mxu0 0.0
        %467 = vmatpush1.msra.mxu0 0.0
        %468 = vmatprep.subr.mxu0 0.0
        %469 = vmatpush1.msra.mxu0 0.0
        %470 = vmatprep.subr.mxu0 0.0
        %471 = vmatpush1.msra.mxu0 0.0
        %472 = vmatprep.subr.mxu0 0.0
        %473 = vmatpush1.msra.mxu0 0.0
        %474 = vmatprep.subr.mxu0 0.0
        %475 = vmatpush1.msra.mxu0 0.0
        %476 = vmatprep.subr.mxu0 0.0
        %477 = vmatpush1.msra.mxu0 0.0
        %478 = vmatprep.subr.mxu0 0.0
        %479 = vmatpush1.msra.mxu0 0.0
        %480 = vmatprep.subr.mxu0 0.0
        %481 = vmatpush1.msra.mxu0 0.0
        %482 = vmatprep.subr.mxu0 0.0
        %483 = vmatpush1.msra.mxu0 0.0
        %484 = vmatprep.mubr.f32.mxu0 0.0
        %485 = vmatmul.mubr.f32.gmra.mrb[0].mxu0 %v388
        %v486 = vpop.f32.mrb[0].mxu0
        %v487 = vadd.f32 0.0, %v486
        %v488 = vpop.f32.mrb[0].mxu0
        %489 = vmatprep.mubr.f32.mxu0 0.0
        %490 = vmatmul.mubr.f32.gmra.mrb[0].mxu0 %v389
        %v491 = vpop.f32.mrb[0].mxu0
        %v492 = vadd.f32 0.0, %v491
        %v493 = vpop.f32.mrb[0].mxu0
        %494 = vmatprep.mubr.f32.mxu0 0.0
        %495 = vmatmul.mubr.f32.gmra.mrb[0].mxu0 %v390
        %v496 = vpop.f32.mrb[0].mxu0
        %v497 = vadd.f32 0.0, %v496
        %v498 = vpop.f32.mrb[0].mxu0
        %499 = vmatprep.mubr.f32.mxu0 0.0
        %500 = vmatmul.mubr.f32.gmra.mrb[0].mxu0 %v391
        %v501 = vpop.f32.mrb[0].mxu0
        %v502 = vadd.f32 0.0, %v501
        %v503 = vpop.f32.mrb[0].mxu0
        %504 = vmatprep.mubr.f32.mxu0 0.0
        %505 = vmatmul.mubr.f32.gmra.mrb[0].mxu0 %v392
        %v506 = vpop.f32.mrb[0].mxu0
        %v507 = vadd.f32 0.0, %v506
        %v508 = vpop.f32.mrb[0].mxu0
        %509 = vmatprep.mubr.f32.mxu0 0.0
        %510 = vmatmul.mubr.f32.gmra.mrb[0].mxu0 %v393
        %v511 = vpop.f32.mrb[0].mxu0
        %v512 = vadd.f32 0.0, %v511
        %v513 = vpop.f32.mrb[0].mxu0
        %514 = vmatprep.mubr.f32.mxu0 0.0
        %515 = vmatmul.mubr.f32.gmra.mrb[0].mxu0 %v394
        %v516 = vpop.f32.mrb[0].mxu0
        %v517 = vadd.f32 0.0, %v516
        %v518 = vpop.f32.mrb[0].mxu0
        %519 = vmatprep.mubr.f32.mxu0 0.0
        %520 = vmatmul.mubr.f32.gmra.mrb[0].mxu0 %v395
        %v521 = vpop.f32.mrb[0].mxu0
        %v522 = vadd.f32 0.0, %v521
        %v523 = vpop.f32.mrb[0].mxu0
        %524 = vmatprep.mubr.f32.mxu0 0.0
        %525 = vmatmul.mubr.f32.gmra.mrb[0].mxu0 %v396
        %v526 = vpop.f32.mrb[0].mxu0
        %v527 = vadd.f32 0.0, %v526
        %v528 = vpop.f32.mrb[0].mxu0
        %529 = vmatprep.mubr.f32.mxu0 0.0
        %530 = vmatmul.mubr.f32.gmra.mrb[0].mxu0 %v397
        %v531 = vpop.f32.mrb[0].mxu0
        %v532 = vadd.f32 0.0, %v531
        %v533 = vpop.f32.mrb[0].mxu0
        %534 = vmatprep.mubr.f32.mxu0 0.0
        %535 = vmatmul.mubr.f32.gmra.mrb[0].mxu0 %v398
        %v536 = vpop.f32.mrb[0].mxu0
        %v537 = vadd.f32 0.0, %v536
        %v538 = vpop.f32.mrb[0].mxu0
        %539 = vmatprep.mubr.f32.mxu0 0.0
        %540 = vmatmul.mubr.f32.gmra.mrb[0].mxu0 %v399
        %v541 = vpop.f32.mrb[0].mxu0
        %v542 = vadd.f32 0.0, %v541
        %v543 = vpop.f32.mrb[0].mxu0
        %544 = vmatprep.mubr.f32.mxu0 0.0
        %545 = vmatmul.mubr.f32.gmra.mrb[0].mxu0 %v400
        %v546 = vpop.f32.mrb[0].mxu0
        %v547 = vadd.f32 0.0, %v546
        %v548 = vpop.f32.mrb[0].mxu0
        %549 = vmatprep.mubr.f32.mxu0 0.0
        %550 = vmatmul.mubr.f32.gmra.mrb[0].mxu0 %v401
        %v551 = vpop.f32.mrb[0].mxu0
        %v552 = vadd.f32 0.0, %v551
        %v553 = vpop.f32.mrb[0].mxu0
        %554 = vmatprep.mubr.f32.mxu0 0.0
        %555 = vmatmul.mubr.f32.gmra.mrb[0].mxu0 %v402
        %v556 = vpop.f32.mrb[0].mxu0
        %v557 = vadd.f32 0.0, %v556
        %v558 = vpop.f32.mrb[0].mxu0
        %559 = vmatprep.mubr.f32.mxu0 0.0
        %560 = vmatmul.mubr.f32.gmra.mrb[0].mxu0 %v403
        %v561 = vpop.f32.mrb[0].mxu0
        %v562 = vadd.f32 0.0, %v561
        %v563 = vpop.f32.mrb[0].mxu0
        %564 = vdwg.mxu0
        %v565 = vadd.f32 %v356, %v487
        %v566 = vadd.f32 %v357, %v492
        %v567 = vadd.f32 %v358, %v497
        %v568 = vadd.f32 %v359, %v502
        %v569 = vadd.f32 %v360, %v507
        %v570 = vadd.f32 %v361, %v512
        %v571 = vadd.f32 %v362, %v517
        %v572 = vadd.f32 %v363, %v522
        %v573 = vadd.f32 %v364, %v527
        %v574 = vadd.f32 %v365, %v532
        %v575 = vadd.f32 %v366, %v537
        %v576 = vadd.f32 %v367, %v542
        %v577 = vadd.f32 %v368, %v547
        %v578 = vadd.f32 %v369, %v552
        %v579 = vadd.f32 %v370, %v557
        %v580 = vadd.f32 %v371, %v562
        %vm581 = vcmask 130048
        %582 = vst.msk [vmem:[#allocation2] sm:$0xff] %vm581, %v565
        %583 = vst.msk [vmem:[#allocation2 + $0x8] sm:$0xff] %vm581, %v566
        %584 = vst.msk [vmem:[#allocation2 + $0x10] sm:$0xff] %vm581, %v567
        %585 = vst.msk [vmem:[#allocation2 + $0x18] sm:$0xff] %vm581, %v568
        %586 = vst.msk [vmem:[#allocation2 + $0x20] sm:$0xff] %vm581, %v569
        %587 = vst.msk [vmem:[#allocation2 + $0x28] sm:$0xff] %vm581, %v570
        %588 = vst.msk [vmem:[#allocation2 + $0x30] sm:$0xff] %vm581, %v571
        %589 = vst.msk [vmem:[#allocation2 + $0x38] sm:$0xff] %vm581, %v572
        %590 = vst.msk [vmem:[#allocation2 + $0x40] sm:$0xff] %vm581, %v573
        %591 = vst.msk [vmem:[#allocation2 + $0x48] sm:$0xff] %vm581, %v574
        %592 = vst.msk [vmem:[#allocation2 + $0x50] sm:$0xff] %vm581, %v575
        %593 = vst.msk [vmem:[#allocation2 + $0x58] sm:$0xff] %vm581, %v576
        %594 = vst.msk [vmem:[#allocation2 + $0x60] sm:$0xff] %vm581, %v577
        %595 = vst.msk [vmem:[#allocation2 + $0x68] sm:$0xff] %vm581, %v578
        %596 = vst.msk [vmem:[#allocation2 + $0x70] sm:$0xff] %vm581, %v579
        %597 = vst.msk [vmem:[#allocation2 + $0x78] sm:$0xff] %vm581, %v580
        %p598 = scmp.eq.s32.totalorder %s19, 1
        // Predicated region
        $region78: #{appnp_net_forward.4} parent=68 // pred_check
          %p599 = pneg %p598
        $region79: #{appnp_net_forward.4} parent=68 // pred_check_branch
          %601 = sbr.rel (%p599) target = $region81
        $region80: #{appnp_net_forward.4} parent=68 // pred_region
          %v602 = vld [vmem:[#allocation2] sm:$0xff]
          %v603 = vld [vmem:[#allocation2 + $0x8] sm:$0xff]
          %v604 = vld [vmem:[#allocation2 + $0x10] sm:$0xff]
          %v605 = vld [vmem:[#allocation2 + $0x18] sm:$0xff]
          %v606 = vld [vmem:[#allocation2 + $0x20] sm:$0xff]
          %v607 = vld [vmem:[#allocation2 + $0x28] sm:$0xff]
          %v608 = vld [vmem:[#allocation2 + $0x30] sm:$0xff]
          %v609 = vld [vmem:[#allocation2 + $0x38] sm:$0xff]
          %v610 = vld [vmem:[#allocation2 + $0x40] sm:$0xff]
          %v611 = vld [vmem:[#allocation2 + $0x48] sm:$0xff]
          %v612 = vld [vmem:[#allocation2 + $0x50] sm:$0xff]
          %v613 = vld [vmem:[#allocation2 + $0x58] sm:$0xff]
          %v614 = vld [vmem:[#allocation2 + $0x60] sm:$0xff]
          %v615 = vld [vmem:[#allocation2 + $0x68] sm:$0xff]
          %v616 = vld [vmem:[#allocation2 + $0x70] sm:$0xff]
          %v617 = vld [vmem:[#allocation2 + $0x78] sm:$0xff]
          %v618 = vmul.f32 %v602, 0.9
          %v619 = vmul.f32 %v603, 0.9
          %v620 = vmul.f32 %v604, 0.9
          %v621 = vmul.f32 %v605, 0.9
          %v622 = vmul.f32 %v606, 0.9
          %v623 = vmul.f32 %v607, 0.9
          %v624 = vmul.f32 %v608, 0.9
          %v625 = vmul.f32 %v609, 0.9
          %v626 = vmul.f32 %v610, 0.9
          %v627 = vmul.f32 %v611, 0.9
          %v628 = vmul.f32 %v612, 0.9
          %v629 = vmul.f32 %v613, 0.9
          %v630 = vmul.f32 %v614, 0.9
          %v631 = vmul.f32 %v615, 0.9
          %v632 = vmul.f32 %v616, 0.9
          %v633 = vmul.f32 %v617, 0.9
          %v634 = vld [vmem:[%s327] sm:$0xff]
          %v635 = vld [vmem:[%s327 + $0x8] sm:$0xff]
          %v636 = vld [vmem:[%s327 + $0x10] sm:$0xff]
          %v637 = vld [vmem:[%s327 + $0x18] sm:$0xff]
          %v638 = vld [vmem:[%s327 + $0x20] sm:$0xff]
          %v639 = vld [vmem:[%s327 + $0x28] sm:$0xff]
          %v640 = vld [vmem:[%s327 + $0x30] sm:$0xff]
          %v641 = vld [vmem:[%s327 + $0x38] sm:$0xff]
          %v642 = vld [vmem:[%s327 + $0x40] sm:$0xff]
          %v643 = vld [vmem:[%s327 + $0x48] sm:$0xff]
          %v644 = vld [vmem:[%s327 + $0x50] sm:$0xff]
          %v645 = vld [vmem:[%s327 + $0x58] sm:$0xff]
          %v646 = vld [vmem:[%s327 + $0x60] sm:$0xff]
          %v647 = vld [vmem:[%s327 + $0x68] sm:$0xff]
          %v648 = vld [vmem:[%s327 + $0x70] sm:$0xff]
          %v649 = vld [vmem:[%s327 + $0x78] sm:$0xff]
          %v650 = vmul.f32 %v634, 0.1
          %v651 = vmul.f32 %v635, 0.1
          %v652 = vmul.f32 %v636, 0.1
          %v653 = vmul.f32 %v637, 0.1
          %v654 = vmul.f32 %v638, 0.1
          %v655 = vmul.f32 %v639, 0.1
          %v656 = vmul.f32 %v640, 0.1
          %v657 = vmul.f32 %v641, 0.1
          %v658 = vmul.f32 %v642, 0.1
          %v659 = vmul.f32 %v643, 0.1
          %v660 = vmul.f32 %v644, 0.1
          %v661 = vmul.f32 %v645, 0.1
          %v662 = vmul.f32 %v646, 0.1
          %v663 = vmul.f32 %v647, 0.1
          %v664 = vmul.f32 %v648, 0.1
          %v665 = vmul.f32 %v649, 0.1
          %v666 = vadd.f32 %v618, %v650
          %v667 = vadd.f32 %v619, %v651
          %v668 = vadd.f32 %v620, %v652
          %v669 = vadd.f32 %v621, %v653
          %v670 = vadd.f32 %v622, %v654
          %v671 = vadd.f32 %v623, %v655
          %v672 = vadd.f32 %v624, %v656
          %v673 = vadd.f32 %v625, %v657
          %v674 = vadd.f32 %v626, %v658
          %v675 = vadd.f32 %v627, %v659
          %v676 = vadd.f32 %v628, %v660
          %v677 = vadd.f32 %v629, %v661
          %v678 = vadd.f32 %v630, %v662
          %v679 = vadd.f32 %v631, %v663
          %v680 = vadd.f32 %v632, %v664
          %v681 = vadd.f32 %v633, %v665
          %682 = vst.msk [vmem:[%s333] sm:$0xff] %vm581, %v666
          %683 = vst.msk [vmem:[%s333 + $0x8] sm:$0xff] %vm581, %v667
          %684 = vst.msk [vmem:[%s333 + $0x10] sm:$0xff] %vm581, %v668
          %685 = vst.msk [vmem:[%s333 + $0x18] sm:$0xff] %vm581, %v669
          %686 = vst.msk [vmem:[%s333 + $0x20] sm:$0xff] %vm581, %v670
          %687 = vst.msk [vmem:[%s333 + $0x28] sm:$0xff] %vm581, %v671
          %688 = vst.msk [vmem:[%s333 + $0x30] sm:$0xff] %vm581, %v672
          %689 = vst.msk [vmem:[%s333 + $0x38] sm:$0xff] %vm581, %v673
          %690 = vst.msk [vmem:[%s333 + $0x40] sm:$0xff] %vm581, %v674
          %691 = vst.msk [vmem:[%s333 + $0x48] sm:$0xff] %vm581, %v675
          %692 = vst.msk [vmem:[%s333 + $0x50] sm:$0xff] %vm581, %v676
          %693 = vst.msk [vmem:[%s333 + $0x58] sm:$0xff] %vm581, %v677
          %694 = vst.msk [vmem:[%s333 + $0x60] sm:$0xff] %vm581, %v678
          %695 = vst.msk [vmem:[%s333 + $0x68] sm:$0xff] %vm581, %v679
          %696 = vst.msk [vmem:[%s333 + $0x70] sm:$0xff] %vm581, %v680
          %697 = vst.msk [vmem:[%s333 + $0x78] sm:$0xff] %vm581, %v681
        $region81: #{appnp_net_forward.4} parent=68 // pred_fallthru
          _
        %s698 = smul.u32 16, %s18
        %p699 = scmp.lt.s32.totalorder %s698, 31
        %s700 = scalar_select %p699, %s698, 31
        %s701 = smul.addr %s700, 8
        %s702 = scalar_lea.vmem %s3, %s701
        // Predicated region
        $region82: #{appnp_net_forward.4} parent=68 // pred_check
          %p703 = pneg %p124
        $region83: #{appnp_net_forward.4} parent=68 // pred_check_branch
          %705 = sbr.rel (%p703) target = $region85
        $region84: #{appnp_net_forward.4} parent=68 // pred_region
          %s706 = smul.u32 16, %s18
        $region85: #{appnp_net_forward.4} parent=68 // pred_fallthru
          _
      $region69: #{appnp_net_forward.4} parent=5 // pred_fallthru
        _
      %p707 = scmp.le.s32.totalorder 2, %s9
      // Predicated region
      $region86: #{appnp_net_forward.4} parent=5 // pred_check
        %p708 = pneg %p707
      $region87: #{appnp_net_forward.4} parent=5 // pred_check_branch
        %710 = sbr.rel (%p708) target = $region89
      $region88: #{appnp_net_forward.4} parent=5 // pred_region
        %s711 = ssub.s32 %s9, 2
        // Predicated region
        $region90: #{appnp_net_forward.4} parent=88 // pred_check
          %p712 = pneg %p130
        $region91: #{appnp_net_forward.4} parent=88 // pred_check_branch
          %714 = sbr.rel (%p712) target = $region93
        $region92: #{appnp_net_forward.4} parent=88 // pred_region
          %s715 = smul.u32 16, %s20
          %p716 = scmp.lt.s32.totalorder %s715, 31
          %s717 = scalar_select %p716, %s715, 31
          %s718 = smul.addr %s717, 8
          %s719 = scalar_lea.vmem %s3, %s718
        $region93: #{appnp_net_forward.4} parent=88 // pred_fallthru
          _
      $region89: #{appnp_net_forward.4} parent=5 // pred_fallthru
        _
    $region6: #{appnp_net_forward.4} parent=1 // loop_footer
      %s13 = sadd.s32 1, %s9
    $region7: #{appnp_net_forward.4} parent=1 // loop_footer_branch
      %8 = sbr.rel target = $region3
    $region8: #{appnp_net_forward.4} parent=1 // loop_exit
      _

</llo_original>
